<compile_context>
chip_gen: v5e
topology: v5e:2x2
jax: 0.10.0
libtpu: 0.0.40
codegen_flags: <defaults>
</compile_context>

<pallas_src>
import functools
import math

import jax
import jax.numpy as jnp
from jax.experimental import pallas as pl
from jax.experimental.pallas import tpu as pltpu

_VMEM_LIMIT = 32 * 1024 * 1024   # conservative scoped-VMEM budget (safe on v5e/v6e/v7x)
_NEG_SLOPE = 0.2
_BN_EPS = 1e-5


def _round_up(x, m):
    return ((x + m - 1) // m) * m


def _split_m(m):
    """Tile M into 2 parallel grid steps when cleanly possible (v7x megacore)."""
    if m % 2 == 0 and (m // 2) % 8 == 0:
        return m // 2
    return m


# -----------------------------------------------------------------------------
# Kernels
# -----------------------------------------------------------------------------
def _conv_lrelu_kernel(p_ref, w_ref, b_ref, o_ref, *, neg_slope):
    # patches (mt, Kp) bf16 @ weights (Kp, CP) bf16 -> f32, + bias, LeakyReLU.
    y = jnp.dot(p_ref[...], w_ref[...], preferred_element_type=jnp.float32)
    y = y + b_ref[...]
    o_ref[...] = jnp.where(y > 0, y, neg_slope * y).astype(o_ref.dtype)


def _conv_bn_lrelu_kernel(p_ref, w_ref, b_ref, g_ref, beta_ref, o_ref, *,
                          inv_m, neg_slope, eps):
    # Single-pass conv + training-mode BatchNorm (biased variance) + LeakyReLU.
    # The whole layer lives in one VMEM block, so batch stats are exact and no
    # f32 intermediate is written to HBM.
    y = jnp.dot(p_ref[...], w_ref[...], preferred_element_type=jnp.float32)
    y = y + b_ref[...]
    mean = jnp.sum(y, axis=0, keepdims=True) * inv_m
    var = jnp.maximum(jnp.sum(y * y, axis=0, keepdims=True) * inv_m - mean * mean, 0.0)
    scale = g_ref[...] * jax.lax.rsqrt(var + eps)      # padded lanes: gamma=0 -> scale=0
    shift = beta_ref[...] - mean * scale
    z = y * scale + shift
    o_ref[...] = jnp.where(z > 0, z, neg_slope * z).astype(o_ref.dtype)


def _conv_bn_lrelu_fc_kernel(p_ref, w_ref, b_ref, g_ref, beta_ref,
                             fcw_ref, fcb_ref, o_ref, *,
                             inv_m, neg_slope, eps, batch, n_spatial, cp,
                             n_conti, n_discrete, num_category):
    # Last conv layer (patch rows ordered (spatial, batch)) + BN + LeakyReLU,
    # then the FC head fused in: Linear + sigmoid(col 0) + masked softmax.
    y = jnp.dot(p_ref[...], w_ref[...], preferred_element_type=jnp.float32)
    y = y + b_ref[...]
    mean = jnp.sum(y, axis=0, keepdims=True) * inv_m
    var = jnp.maximum(jnp.sum(y * y, axis=0, keepdims=True) * inv_m - mean * mean, 0.0)
    scale = g_ref[...] * jax.lax.rsqrt(var + eps)
    shift = beta_ref[...] - mean * scale
    z = y * scale + shift
    act = jnp.where(z > 0, z, neg_slope * z).astype(jnp.bfloat16)  # (n_spatial*batch, cp)

    # FC: out[n, :] = sum_hw act[hw*batch + n, :] @ W'[hw]; W'[hw] already encodes
    # the PyTorch NCHW-flatten column permutation (built in __init__).
    acc = jnp.zeros((batch, fcb_ref.shape[1]), jnp.float32)
    for hw in range(n_spatial):                                   # unrolled, 16 taps
        a = act[hw * batch:(hw + 1) * batch, :]                   # (batch, cp) bf16
        wblk = fcw_ref[hw * cp:(hw + 1) * cp, :]                  # (cp, n_out_pad) bf16
        acc = acc + jnp.dot(a, wblk, preferred_element_type=jnp.float32)
    logits = acc + fcb_ref[...]

    col = jax.lax.broadcasted_iota(jnp.int32, logits.shape, 1)
    out = logits
    out = jnp.where(col == 0, 1.0 / (1.0 + jnp.exp(-logits)), out)  # exact sigmoid
    for j in range(n_discrete):
        start = 1 + n_conti + j * num_category
        end = start + num_category
        mask = (col >= start) & (col < end)
        lg = jnp.where(mask, logits, -jnp.inf)
        m = jnp.max(lg, axis=1, keepdims=True)
        e = jnp.where(mask, jnp.exp(lg - m), 0.0)
        out = jnp.where(mask, e / jnp.sum(e, axis=1, keepdims=True), out)  # exact softmax
    o_ref[...] = out


# -----------------------------------------------------------------------------
# pallas_call wrappers
# -----------------------------------------------------------------------------
def conv_lrelu(patches, w_mat, bias):
    m, kp = patches.shape
    cp = w_mat.shape[1]
    mt = _split_m(m)
    return pl.pallas_call(
        functools.partial(_conv_lrelu_kernel, neg_slope=_NEG_SLOPE),
        out_shape=jax.ShapeDtypeStruct((m, cp), jnp.bfloat16),
        grid_spec=pltpu.PrefetchScalarGridSpec(
            num_scalar_prefetch=0, grid=(m // mt,),
            in_specs=[pl.BlockSpec((mt, kp), lambda i: (i, 0)),
                      pl.BlockSpec((kp, cp), lambda i: (0, 0)),
                      pl.BlockSpec((1, cp), lambda i: (0, 0))],
            out_specs=pl.BlockSpec((mt, cp), lambda i: (i, 0))),
        compiler_params=pltpu.CompilerParams(
            dimension_semantics=("parallel",),
            vmem_limit_bytes=_VMEM_LIMIT),
    )(patches, w_mat, bias)


def conv_bn_lrelu(patches, w_mat, bias, gamma, beta):
    # Whole layer in one VMEM-resident block (M <= 128 rows at this config).
    # TODO(synk): for large M, reintroduce M-tiling with resident stat accumulators.
    m, _ = patches.shape
    cp = w_mat.shape[1]
    kernel = functools.partial(_conv_bn_lrelu_kernel, inv_m=1.0 / m,
                               neg_slope=_NEG_SLOPE, eps=_BN_EPS)
    return pl.pallas_call(
        kernel,
        out_shape=jax.ShapeDtypeStruct((m, cp), jnp.bfloat16),
        in_specs=[pl.BlockSpec(memory_space=pltpu.MemorySpace.VMEM)] * 5,
        out_specs=pl.BlockSpec(memory_space=pltpu.MemorySpace.VMEM),
        compiler_params=pltpu.CompilerParams(vmem_limit_bytes=_VMEM_LIMIT),
    )(patches, w_mat, bias, gamma, beta)


def conv_bn_lrelu_fc(patches, w_mat, bias, gamma, beta, fc_w, fc_b, *,
                     batch, n_spatial, n_conti, n_discrete, num_category):
    m, _ = patches.shape
    cp = w_mat.shape[1]
    n_out_pad = fc_w.shape[1]
    kernel = functools.partial(
        _conv_bn_lrelu_fc_kernel, inv_m=1.0 / m, neg_slope=_NEG_SLOPE, eps=_BN_EPS,
        batch=batch, n_spatial=n_spatial, cp=cp,
        n_conti=n_conti, n_discrete=n_discrete, num_category=num_category)
    return pl.pallas_call(
        kernel,
        out_shape=jax.ShapeDtypeStruct((batch, n_out_pad), jnp.float32),
        in_specs=[pl.BlockSpec(memory_space=pltpu.MemorySpace.VMEM)] * 7,
        out_specs=pl.BlockSpec(memory_space=pltpu.MemorySpace.VMEM),
        compiler_params=pltpu.CompilerParams(vmem_limit_bytes=_VMEM_LIMIT),
    )(patches, w_mat, bias, gamma, beta, fc_w, fc_b)


# -----------------------------------------------------------------------------
# Glue: im2col for k=5, stride=2, pad=2 (layout plumbing, not compute)
# -----------------------------------------------------------------------------
def im2col(x_nhwc, k=5, stride=2, pad=2, k_cols=None, order="nhw"):
    # TODO(synk): fold this patch extraction into the conv kernels (in-kernel
    # strided gather) to remove the duplicated patch HBM traffic entirely.
    n, h, w, c = x_nhwc.shape
    ho = (h + 2 * pad - k) // stride + 1
    wo = (w + 2 * pad - k) // stride + 1
    xp = jnp.pad(x_nhwc, ((0, 0), (pad, pad), (pad, pad), (0, 0)))
    taps = []
    for kh in range(k):
        for kw in range(k):
            taps.append(xp[:, kh:kh + stride * (ho - 1) + 1:stride,
                           kw:kw + stride * (wo - 1) + 1:stride, :])
    pat = jnp.stack(taps, axis=-1)                       # (n, ho, wo, c, k*k)
    if order == "hwn":                                   # rows ordered (ho, wo, n)
        pat = jnp.transpose(pat, (1, 2, 0, 3, 4))
    pat = pat.reshape(n * ho * wo, c * k * k)            # cols ordered (cin, kh, kw)
    if k_cols is not None and k_cols > c * k * k:
        pat = jnp.pad(pat, ((0, 0), (0, k_cols - c * k * k)))
    return pat, (n, ho, wo)


# -----------------------------------------------------------------------------
# Module: parameters + forward (mirrors InfoGAN_Discriminator)
# -----------------------------------------------------------------------------
class InfoGANDiscriminatorPallas:
    def __init__(self, key, n_layer=3, n_conti=2, n_discrete=1,
                 num_category=10, featmap_dim=32, n_channel=1):
        assert n_layer == 3, "kernel assembly assumes the 3-layer DCGAN stack"
        self.n_layer = n_layer
        self.n_conti = n_conti
        self.n_discrete = n_discrete
        self.num_category = num_category
        self.featmap_dim = featmap_dim

        # Conv / BN parameters, pre-reshaped and lane-padded once.
        self.layers = []
        for layer in range(n_layer):
            n_in = n_channel if layer == n_layer - 1 else featmap_dim // (2 ** (layer + 1))
            n_out = featmap_dim // (2 ** layer)
            key, kw_, kb_, kg_, kbe_ = jax.random.split(key, 5)
            bound = 1.0 / math.sqrt(n_in * 25)
            w = jax.random.uniform(kw_, (n_out, n_in, 5, 5), jnp.float32, -bound, bound)
            b = jax.random.uniform(kb_, (1, n_out), jnp.float32, -bound, bound)

            kdim = n_in * 25
            k_pad = _round_up(kdim, 128)      # lane-dense patch / weight K dim
            cp = _round_up(n_out, 128)        # lane-dense output channels
            w_mat = w.reshape(n_out, kdim).T  # (K, Cout), rows ordered (cin, kh, kw)
            w_mat = jnp.pad(w_mat, ((0, k_pad - kdim), (0, cp - n_out))).astype(jnp.bfloat16)
            b_pad = jnp.pad(b, ((0, 0), (0, cp - n_out)))

            if layer != n_layer - 1:
                gamma = 1.0 + 0.1 * jax.random.normal(kg_, (1, n_out), jnp.float32)
                beta = 0.1 * jax.random.normal(kbe_, (1, n_out), jnp.float32)
                # Pad gamma/beta with 0: padded channels stay exactly 0 after BN.
                gamma_pad = jnp.pad(gamma, ((0, 0), (0, cp - n_out)))
                beta_pad = jnp.pad(beta, ((0, 0), (0, cp - n_out)))
            else:
                gamma_pad = beta_pad = None

            self.layers.append(dict(w_mat=w_mat, bias=b_pad, gamma=gamma_pad,
                                    beta=beta_pad, cout=n_out, k_pad=k_pad))

        # FC head. PyTorch flattens NCHW: flat index = c*16 + hw. Build per-spatial
        # weight blocks W'[hw] (c_pad x n_out_pad) so the fused last kernel consumes
        # the conv output rows (ordered (hw, n)) without any transpose/reshape.
        self.n_spatial = 16                                  # 4x4 final feature map
        n_hidden = featmap_dim * self.n_spatial
        self.n_output = 1 + n_conti + n_discrete * num_category
        self.n_out_pad = _round_up(self.n_output, 128)
        c_last = featmap_dim
        c_last_pad = _round_up(c_last, 128)
        key, kfw, kfb = jax.random.split(key, 3)
        bound = 1.0 / math.sqrt(n_hidden)
        fc_w = jax.random.uniform(kfw, (self.n_output, n_hidden), jnp.float32, -bound, bound)
        fc_b = jax.random.uniform(kfb, (1, self.n_output), jnp.float32, -bound, bound)

        w_blocks = fc_w.reshape(self.n_output, c_last, self.n_spatial)   # (out, c, hw)
        w_blocks = jnp.transpose(w_blocks, (2, 1, 0))                    # (hw, c, out)
        w_blocks = jnp.pad(w_blocks, ((0, 0), (0, c_last_pad - c_last),
                                      (0, self.n_out_pad - self.n_output)))
        self.fc_w = w_blocks.reshape(self.n_spatial * c_last_pad,
                                     self.n_out_pad).astype(jnp.bfloat16)  # (2048, 128)
        self.fc_b = jnp.pad(fc_b, ((0, 0), (0, self.n_out_pad - self.n_output)))

    def __call__(self, x_nchw):
        n = x_nchw.shape[0]
        x = jnp.transpose(x_nchw, (0, 2, 3, 1)).astype(jnp.bfloat16)     # NHWC, bf16

        # Applied layers 0 .. n_layer-2 (PyTorch iterates convs in reverse order).
        for layer in range(self.n_layer - 1):
            lp = self.layers[self.n_layer - layer - 1]
            patches, (_, ho, wo) = im2col(x, k_cols=lp['k_pad'])
            if layer == 0:        # first applied conv has no BatchNorm
                y = conv_lrelu(patches, lp['w_mat'], lp['bias'])
            else:                 # fused single-pass conv + BN + LeakyReLU
                y = conv_bn_lrelu(patches, lp['w_mat'], lp['bias'],
                                  lp['gamma'], lp['beta'])
            x = y[:, :lp['cout']].reshape(n, ho, wo, lp['cout'])          # drop lane pad

        # Last applied layer (convs[0]) fused with BN + LeakyReLU + FC head.
        lp = self.layers[0]
        patches, (_, ho, wo) = im2col(x, k_cols=lp['k_pad'], order="hwn")
        assert ho * wo == self.n_spatial, "expects a 4x4 final feature map (32x32 input)"
        out = conv_bn_lrelu_fc(
            patches, lp['w_mat'], lp['bias'], lp['gamma'], lp['beta'],
            self.fc_w, self.fc_b, batch=n, n_spatial=self.n_spatial,
            n_conti=self.n_conti, n_discrete=self.n_discrete,
            num_category=self.num_category)
        return out[:, :self.n_output]


if __name__ == "__main__":
    key = jax.random.PRNGKey(0)
    k_params, k_x = jax.random.split(key)

    # Small config: featmap_dim=32 (instead of 256), n_channel=1.
    # The hard-coded 4x4 final spatial map implies a 32x32 input.
    model = InfoGANDiscriminatorPallas(k_params, featmap_dim=32, n_channel=1)
    x = jax.random.normal(k_x, (2, 1, 32, 32), dtype=jnp.float32)

    forward = jax.jit(model.__call__)
    out = jax.block_until_ready(forward(x))

    n_output = 1 + model.n_conti + model.n_discrete * model.num_category
    assert out.shape == (2, n_output), out.shape
    assert bool(jnp.all(jnp.isfinite(out)))
    # Column 0 is an exact sigmoid probability; the categorical block is an exact
    # f32 softmax so its rows sum to 1.
    assert bool(jnp.all((out[:, 0] >= 0.0) & (out[:, 0] <= 1.0)))
    cat = out[:, 1 + model.n_conti: 1 + model.n_conti + model.num_category]
    assert bool(jnp.allclose(jnp.sum(cat, axis=1), 1.0, atol=1e-3))
    print("KERNEL_OK")
</pallas_src>

<mosaic_0001>
module attributes {stable_mosaic.version = 11 : i64} {
  func.func @_conv_lrelu_kernel(%arg0: i32, %arg1: memref<256x128xbf16, #tpu.memory_space<vmem>>, %arg2: memref<128x128xbf16, #tpu.memory_space<vmem>>, %arg3: memref<1x128xf32, #tpu.memory_space<vmem>>, %arg4: memref<256x128xbf16, #tpu.memory_space<vmem>>) attributes {dimension_semantics = [#tpu.dimension_semantics<parallel>], iteration_bounds = array<i64: 2>, scalar_prefetch = 0 : i64, scratch_operands = 0 : i64, tpu.core_type = #tpu.core_type<tc>, window_params = [{transform_indices = @transform_0, window_bounds = array<i64: 256, 128>}, {pipeline_mode = #tpu.pipeline_mode<synchronous>, transform_indices = @transform_1, window_bounds = array<i64: 128, 128>}, {pipeline_mode = #tpu.pipeline_mode<synchronous>, transform_indices = @transform_2, window_bounds = array<i64: 1, 128>}, {transform_indices = @transform_3, window_bounds = array<i64: 256, 128>}]} {
    %c0 = arith.constant 0 : index
    %c0_0 = arith.constant 0 : index
    %0 = vector.load %arg1[%c0, %c0_0] : memref<256x128xbf16, #tpu.memory_space<vmem>>, vector<256x128xbf16>
    %c0_1 = arith.constant 0 : index
    %c0_2 = arith.constant 0 : index
    %1 = vector.load %arg2[%c0_1, %c0_2] : memref<128x128xbf16, #tpu.memory_space<vmem>>, vector<128x128xbf16>
    %cst = arith.constant dense<0.000000e+00> : vector<256x128xf32>
    %2 = tpu.matmul %0, %1, %cst {dimension_numbers = #tpu.dot_dimension_numbers<[1], [0], [0], [1], [0, 0, 1, 1], [], []>} : vector<256x128xbf16>, vector<128x128xbf16>, vector<256x128xf32> -> vector<256x128xf32>
    %c0_3 = arith.constant 0 : index
    %c0_4 = arith.constant 0 : index
    %3 = vector.load %arg3[%c0_3, %c0_4] : memref<1x128xf32, #tpu.memory_space<vmem>>, vector<1x128xf32>
    %4 = vector.broadcast %3 : vector<1x128xf32> to vector<256x128xf32>
    %5 = arith.addf %2, %4 : vector<256x128xf32>
    %cst_5 = arith.constant 0.000000e+00 : f32
    %6 = vector.broadcast %cst_5 : f32 to vector<256x128xf32>
    %7 = arith.cmpf ogt, %5, %6 : vector<256x128xf32>
    %cst_6 = arith.constant 2.000000e-01 : f32
    %8 = vector.broadcast %cst_6 : f32 to vector<256x128xf32>
    %9 = arith.mulf %8, %5 : vector<256x128xf32>
    %10 = arith.select %7, %5, %9 : vector<256x128xi1>, vector<256x128xf32>
    %11 = arith.truncf %10 : vector<256x128xf32> to vector<256x128xbf16>
    %c0_7 = arith.constant 0 : index
    %c0_8 = arith.constant 0 : index
    %12 = vector.load %arg4[%c0_7, %c0_8] : memref<256x128xbf16, #tpu.memory_space<vmem>>, vector<256x128xbf16>
    tpu.vector_store %arg4[%c0_7, %c0_8], %11 {strides = array<i32>} : memref<256x128xbf16, #tpu.memory_space<vmem>>, vector<256x128xbf16>,
    return
  }
  func.func @transform_0(%arg0: i32) -> (i32, i32) {
    %c0_i32 = arith.constant 0 : i32
    %c0_i32_0 = arith.constant 0 : i32
    return %arg0, %c0_i32 : i32, i32
  }
  func.func @transform_1(%arg0: i32) -> (i32, i32) {
    %c0_i32 = arith.constant 0 : i32
    %c0_i32_0 = arith.constant 0 : i32
    %c0_i32_1 = arith.constant 0 : i32
    return %c0_i32, %c0_i32_0 : i32, i32
  }
  func.func @transform_2(%arg0: i32) -> (i32, i32) {
    %c0_i32 = arith.constant 0 : i32
    %c0_i32_0 = arith.constant 0 : i32
    %c0_i32_1 = arith.constant 0 : i32
    return %c0_i32, %c0_i32_0 : i32, i32
  }
  func.func @transform_3(%arg0: i32) -> (i32, i32) {
    %c0_i32 = arith.constant 0 : i32
    %c0_i32_0 = arith.constant 0 : i32
    return %arg0, %c0_i32 : i32, i32
  }
}

module attributes {stable_mosaic.version = 11 : i64} {
  func.func @_conv_bn_lrelu_kernel(%arg0: memref<128x256xbf16, #tpu.memory_space<vmem>>, %arg1: memref<256x128xbf16, #tpu.memory_space<vmem>>, %arg2: memref<1x128xf32, #tpu.memory_space<vmem>>, %arg3: memref<1x128xf32, #tpu.memory_space<vmem>>, %arg4: memref<1x128xf32, #tpu.memory_space<vmem>>, %arg5: memref<128x128xbf16, #tpu.memory_space<vmem>>) attributes {dimension_semantics = [], scalar_prefetch = 0 : i64, scratch_operands = 0 : i64, tpu.core_type = #tpu.core_type<tc>} {
    %c0 = arith.constant 0 : index
    %c0_0 = arith.constant 0 : index
    %0 = vector.load %arg0[%c0, %c0_0] : memref<128x256xbf16, #tpu.memory_space<vmem>>, vector<128x256xbf16>
    %c0_1 = arith.constant 0 : index
    %c0_2 = arith.constant 0 : index
    %1 = vector.load %arg1[%c0_1, %c0_2] : memref<256x128xbf16, #tpu.memory_space<vmem>>, vector<256x128xbf16>
    %cst = arith.constant dense<0.000000e+00> : vector<128x128xf32>
    %2 = tpu.matmul %0, %1, %cst {dimension_numbers = #tpu.dot_dimension_numbers<[1], [0], [0], [1], [0, 0, 1, 1], [], []>} : vector<128x256xbf16>, vector<256x128xbf16>, vector<128x128xf32> -> vector<128x128xf32>
    %c0_3 = arith.constant 0 : index
    %c0_4 = arith.constant 0 : index
    %3 = vector.load %arg2[%c0_3, %c0_4] : memref<1x128xf32, #tpu.memory_space<vmem>>, vector<1x128xf32>
    %4 = vector.broadcast %3 : vector<1x128xf32> to vector<128x128xf32>
    %5 = arith.addf %2, %4 : vector<128x128xf32>
    %cst_5 = arith.constant dense<0.000000e+00> : vector<128xf32>
    %6 = vector.multi_reduction <add>, %5, %cst_5 [0] : vector<128x128xf32> to vector<128xf32>
    %7 = vector.shape_cast %6 : vector<128xf32> to vector<1x128xf32>
    %cst_6 = arith.constant 7.812500e-03 : f32
    %8 = vector.broadcast %cst_6 : f32 to vector<1x128xf32>
    %9 = arith.mulf %7, %8 : vector<1x128xf32>
    %10 = arith.mulf %5, %5 : vector<128x128xf32>
    %cst_7 = arith.constant dense<0.000000e+00> : vector<128xf32>
    %11 = vector.multi_reduction <add>, %10, %cst_7 [0] : vector<128x128xf32> to vector<128xf32>
    %12 = vector.shape_cast %11 : vector<128xf32> to vector<1x128xf32>
    %cst_8 = arith.constant 7.812500e-03 : f32
    %13 = vector.broadcast %cst_8 : f32 to vector<1x128xf32>
    %14 = arith.mulf %12, %13 : vector<1x128xf32>
    %15 = arith.mulf %9, %9 : vector<1x128xf32>
    %16 = arith.subf %14, %15 : vector<1x128xf32>
    %cst_9 = arith.constant 0.000000e+00 : f32
    %17 = vector.broadcast %cst_9 : f32 to vector<1x128xf32>
    %18 = arith.maximumf %16, %17 : vector<1x128xf32>
    %c0_10 = arith.constant 0 : index
    %c0_11 = arith.constant 0 : index
    %19 = vector.load %arg3[%c0_10, %c0_11] : memref<1x128xf32, #tpu.memory_space<vmem>>, vector<1x128xf32>
    %cst_12 = arith.constant 9.99999974E-6 : f32
    %20 = vector.broadcast %cst_12 : f32 to vector<1x128xf32>
    %21 = arith.addf %18, %20 : vector<1x128xf32>
    %22 = math.rsqrt %21 : vector<1x128xf32>
    %23 = arith.mulf %19, %22 : vector<1x128xf32>
    %c0_13 = arith.constant 0 : index
    %c0_14 = arith.constant 0 : index
    %24 = vector.load %arg4[%c0_13, %c0_14] : memref<1x128xf32, #tpu.memory_space<vmem>>, vector<1x128xf32>
    %25 = arith.mulf %9, %23 : vector<1x128xf32>
    %26 = arith.subf %24, %25 : vector<1x128xf32>
    %27 = vector.broadcast %23 : vector<1x128xf32> to vector<128x128xf32>
    %28 = arith.mulf %5, %27 : vector<128x128xf32>
    %29 = vector.broadcast %26 : vector<1x128xf32> to vector<128x128xf32>
    %30 = arith.addf %28, %29 : vector<128x128xf32>
    %cst_15 = arith.constant 0.000000e+00 : f32
    %31 = vector.broadcast %cst_15 : f32 to vector<128x128xf32>
    %32 = arith.cmpf ogt, %30, %31 : vector<128x128xf32>
    %cst_16 = arith.constant 2.000000e-01 : f32
    %33 = vector.broadcast %cst_16 : f32 to vector<128x128xf32>
    %34 = arith.mulf %33, %30 : vector<128x128xf32>
    %35 = arith.select %32, %30, %34 : vector<128x128xi1>, vector<128x128xf32>
    %36 = arith.truncf %35 : vector<128x128xf32> to vector<128x128xbf16>
    %c0_17 = arith.constant 0 : index
    %c0_18 = arith.constant 0 : index
    %37 = vector.load %arg5[%c0_17, %c0_18] : memref<128x128xbf16, #tpu.memory_space<vmem>>, vector<128x128xbf16>
    tpu.vector_store %arg5[%c0_17, %c0_18], %36 {strides = array<i32>} : memref<128x128xbf16, #tpu.memory_space<vmem>>, vector<128x128xbf16>,
    return
  }
}

module attributes {stable_mosaic.version = 11 : i64} {
  func.func @_conv_bn_lrelu_fc_kernel(%arg0: memref<32x512xbf16, #tpu.memory_space<vmem>>, %arg1: memref<512x128xbf16, #tpu.memory_space<vmem>>, %arg2: memref<1x128xf32, #tpu.memory_space<vmem>>, %arg3: memref<1x128xf32, #tpu.memory_space<vmem>>, %arg4: memref<1x128xf32, #tpu.memory_space<vmem>>, %arg5: memref<2048x128xbf16, #tpu.memory_space<vmem>>, %arg6: memref<1x128xf32, #tpu.memory_space<vmem>>, %arg7: memref<2x128xf32, #tpu.memory_space<vmem>>) attributes {dimension_semantics = [], scalar_prefetch = 0 : i64, scratch_operands = 0 : i64, tpu.core_type = #tpu.core_type<tc>} {
    %c0 = arith.constant 0 : index
    %c0_0 = arith.constant 0 : index
    %0 = vector.load %arg0[%c0, %c0_0] : memref<32x512xbf16, #tpu.memory_space<vmem>>, vector<32x512xbf16>
    %c0_1 = arith.constant 0 : index
    %c0_2 = arith.constant 0 : index
    %1 = vector.load %arg1[%c0_1, %c0_2] : memref<512x128xbf16, #tpu.memory_space<vmem>>, vector<512x128xbf16>
    %cst = arith.constant dense<0.000000e+00> : vector<32x128xf32>
    %2 = tpu.matmul %0, %1, %cst {dimension_numbers = #tpu.dot_dimension_numbers<[1], [0], [0], [1], [0, 0, 1, 1], [], []>} : vector<32x512xbf16>, vector<512x128xbf16>, vector<32x128xf32> -> vector<32x128xf32>
    %c0_3 = arith.constant 0 : index
    %c0_4 = arith.constant 0 : index
    %3 = vector.load %arg2[%c0_3, %c0_4] : memref<1x128xf32, #tpu.memory_space<vmem>>, vector<1x128xf32>
    %4 = vector.broadcast %3 : vector<1x128xf32> to vector<32x128xf32>
    %5 = arith.addf %2, %4 : vector<32x128xf32>
    %cst_5 = arith.constant dense<0.000000e+00> : vector<128xf32>
    %6 = vector.multi_reduction <add>, %5, %cst_5 [0] : vector<32x128xf32> to vector<128xf32>
    %7 = vector.shape_cast %6 : vector<128xf32> to vector<1x128xf32>
    %cst_6 = arith.constant 3.125000e-02 : f32
    %8 = vector.broadcast %cst_6 : f32 to vector<1x128xf32>
    %9 = arith.mulf %7, %8 : vector<1x128xf32>
    %10 = arith.mulf %5, %5 : vector<32x128xf32>
    %cst_7 = arith.constant dense<0.000000e+00> : vector<128xf32>
    %11 = vector.multi_reduction <add>, %10, %cst_7 [0] : vector<32x128xf32> to vector<128xf32>
    %12 = vector.shape_cast %11 : vector<128xf32> to vector<1x128xf32>
    %cst_8 = arith.constant 3.125000e-02 : f32
    %13 = vector.broadcast %cst_8 : f32 to vector<1x128xf32>
    %14 = arith.mulf %12, %13 : vector<1x128xf32>
    %15 = arith.mulf %9, %9 : vector<1x128xf32>
    %16 = arith.subf %14, %15 : vector<1x128xf32>
    %cst_9 = arith.constant 0.000000e+00 : f32
    %17 = vector.broadcast %cst_9 : f32 to vector<1x128xf32>
    %18 = arith.maximumf %16, %17 : vector<1x128xf32>
    %c0_10 = arith.constant 0 : index
    %c0_11 = arith.constant 0 : index
    %19 = vector.load %arg3[%c0_10, %c0_11] : memref<1x128xf32, #tpu.memory_space<vmem>>, vector<1x128xf32>
    %cst_12 = arith.constant 9.99999974E-6 : f32
    %20 = vector.broadcast %cst_12 : f32 to vector<1x128xf32>
    %21 = arith.addf %18, %20 : vector<1x128xf32>
    %22 = math.rsqrt %21 : vector<1x128xf32>
    %23 = arith.mulf %19, %22 : vector<1x128xf32>
    %c0_13 = arith.constant 0 : index
    %c0_14 = arith.constant 0 : index
    %24 = vector.load %arg4[%c0_13, %c0_14] : memref<1x128xf32, #tpu.memory_space<vmem>>, vector<1x128xf32>
    %25 = arith.mulf %9, %23 : vector<1x128xf32>
    %26 = arith.subf %24, %25 : vector<1x128xf32>
    %27 = vector.broadcast %23 : vector<1x128xf32> to vector<32x128xf32>
    %28 = arith.mulf %5, %27 : vector<32x128xf32>
    %29 = vector.broadcast %26 : vector<1x128xf32> to vector<32x128xf32>
    %30 = arith.addf %28, %29 : vector<32x128xf32>
    %cst_15 = arith.constant 0.000000e+00 : f32
    %31 = vector.broadcast %cst_15 : f32 to vector<32x128xf32>
    %32 = arith.cmpf ogt, %30, %31 : vector<32x128xf32>
    %cst_16 = arith.constant 2.000000e-01 : f32
    %33 = vector.broadcast %cst_16 : f32 to vector<32x128xf32>
    %34 = arith.mulf %33, %30 : vector<32x128xf32>
    %35 = arith.select %32, %30, %34 : vector<32x128xi1>, vector<32x128xf32>
    %36 = arith.truncf %35 : vector<32x128xf32> to vector<32x128xbf16>
    %cst_17 = arith.constant 0.000000e+00 : f32
    %37 = vector.broadcast %cst_17 : f32 to vector<2x128xf32>
    %38 = vector.extract_strided_slice %36 {offsets = [0, 0], sizes = [2, 128], strides = [1, 1]} : vector<32x128xbf16> to vector<2x128xbf16>
    %c0_18 = arith.constant 0 : index
    %c0_19 = arith.constant 0 : index
    %39 = vector.load %arg5[%c0_18, %c0_19] : memref<2048x128xbf16, #tpu.memory_space<vmem>>, vector<128x128xbf16>
    %cst_20 = arith.constant dense<0.000000e+00> : vector<2x128xf32>
    %40 = tpu.matmul %38, %39, %cst_20 {dimension_numbers = #tpu.dot_dimension_numbers<[1], [0], [0], [1], [0, 0, 1, 1], [], []>} : vector<2x128xbf16>, vector<128x128xbf16>, vector<2x128xf32> -> vector<2x128xf32>
    %41 = arith.addf %37, %40 : vector<2x128xf32>
    %42 = vector.extract_strided_slice %36 {offsets = [2, 0], sizes = [2, 128], strides = [1, 1]} : vector<32x128xbf16> to vector<2x128xbf16>
    %c128 = arith.constant 128 : index
    %c0_21 = arith.constant 0 : index
    %43 = vector.load %arg5[%c128, %c0_21] : memref<2048x128xbf16, #tpu.memory_space<vmem>>, vector<128x128xbf16>
    %cst_22 = arith.constant dense<0.000000e+00> : vector<2x128xf32>
    %44 = tpu.matmul %42, %43, %cst_22 {dimension_numbers = #tpu.dot_dimension_numbers<[1], [0], [0], [1], [0, 0, 1, 1], [], []>} : vector<2x128xbf16>, vector<128x128xbf16>, vector<2x128xf32> -> vector<2x128xf32>
    %45 = arith.addf %41, %44 : vector<2x128xf32>
    %46 = vector.extract_strided_slice %36 {offsets = [4, 0], sizes = [2, 128], strides = [1, 1]} : vector<32x128xbf16> to vector<2x128xbf16>
    %c256 = arith.constant 256 : index
    %c0_23 = arith.constant 0 : index
    %47 = vector.load %arg5[%c256, %c0_23] : memref<2048x128xbf16, #tpu.memory_space<vmem>>, vector<128x128xbf16>
    %cst_24 = arith.constant dense<0.000000e+00> : vector<2x128xf32>
    %48 = tpu.matmul %46, %47, %cst_24 {dimension_numbers = #tpu.dot_dimension_numbers<[1], [0], [0], [1], [0, 0, 1, 1], [], []>} : vector<2x128xbf16>, vector<128x128xbf16>, vector<2x128xf32> -> vector<2x128xf32>
    %49 = arith.addf %45, %48 : vector<2x128xf32>
    %50 = vector.extract_strided_slice %36 {offsets = [6, 0], sizes = [2, 128], strides = [1, 1]} : vector<32x128xbf16> to vector<2x128xbf16>
    %c384 = arith.constant 384 : index
    %c0_25 = arith.constant 0 : index
    %51 = vector.load %arg5[%c384, %c0_25] : memref<2048x128xbf16, #tpu.memory_space<vmem>>, vector<128x128xbf16>
    %cst_26 = arith.constant dense<0.000000e+00> : vector<2x128xf32>
    %52 = tpu.matmul %50, %51, %cst_26 {dimension_numbers = #tpu.dot_dimension_numbers<[1], [0], [0], [1], [0, 0, 1, 1], [], []>} : vector<2x128xbf16>, vector<128x128xbf16>, vector<2x128xf32> -> vector<2x128xf32>
    %53 = arith.addf %49, %52 : vector<2x128xf32>
    %54 = vector.extract_strided_slice %36 {offsets = [8, 0], sizes = [2, 128], strides = [1, 1]} : vector<32x128xbf16> to vector<2x128xbf16>
    %c512 = arith.constant 512 : index
    %c0_27 = arith.constant 0 : index
    %55 = vector.load %arg5[%c512, %c0_27] : memref<2048x128xbf16, #tpu.memory_space<vmem>>, vector<128x128xbf16>
    %cst_28 = arith.constant dense<0.000000e+00> : vector<2x128xf32>
    %56 = tpu.matmul %54, %55, %cst_28 {dimension_numbers = #tpu.dot_dimension_numbers<[1], [0], [0], [1], [0, 0, 1, 1], [], []>} : vector<2x128xbf16>, vector<128x128xbf16>, vector<2x128xf32> -> vector<2x128xf32>
    %57 = arith.addf %53, %56 : vector<2x128xf32>
    %58 = vector.extract_strided_slice %36 {offsets = [10, 0], sizes = [2, 128], strides = [1, 1]} : vector<32x128xbf16> to vector<2x128xbf16>
    %c640 = arith.constant 640 : index
    %c0_29 = arith.constant 0 : index
    %59 = vector.load %arg5[%c640, %c0_29] : memref<2048x128xbf16, #tpu.memory_space<vmem>>, vector<128x128xbf16>
    %cst_30 = arith.constant dense<0.000000e+00> : vector<2x128xf32>
    %60 = tpu.matmul %58, %59, %cst_30 {dimension_numbers = #tpu.dot_dimension_numbers<[1], [0], [0], [1], [0, 0, 1, 1], [], []>} : vector<2x128xbf16>, vector<128x128xbf16>, vector<2x128xf32> -> vector<2x128xf32>
    %61 = arith.addf %57, %60 : vector<2x128xf32>
    %62 = vector.extract_strided_slice %36 {offsets = [12, 0], sizes = [2, 128], strides = [1, 1]} : vector<32x128xbf16> to vector<2x128xbf16>
    %c768 = arith.constant 768 : index
    %c0_31 = arith.constant 0 : index
    %63 = vector.load %arg5[%c768, %c0_31] : memref<2048x128xbf16, #tpu.memory_space<vmem>>, vector<128x128xbf16>
    %cst_32 = arith.constant dense<0.000000e+00> : vector<2x128xf32>
    %64 = tpu.matmul %62, %63, %cst_32 {dimension_numbers = #tpu.dot_dimension_numbers<[1], [0], [0], [1], [0, 0, 1, 1], [], []>} : vector<2x128xbf16>, vector<128x128xbf16>, vector<2x128xf32> -> vector<2x128xf32>
    %65 = arith.addf %61, %64 : vector<2x128xf32>
    %66 = vector.extract_strided_slice %36 {offsets = [14, 0], sizes = [2, 128], strides = [1, 1]} : vector<32x128xbf16> to vector<2x128xbf16>
    %c896 = arith.constant 896 : index
    %c0_33 = arith.constant 0 : index
    %67 = vector.load %arg5[%c896, %c0_33] : memref<2048x128xbf16, #tpu.memory_space<vmem>>, vector<128x128xbf16>
    %cst_34 = arith.constant dense<0.000000e+00> : vector<2x128xf32>
    %68 = tpu.matmul %66, %67, %cst_34 {dimension_numbers = #tpu.dot_dimension_numbers<[1], [0], [0], [1], [0, 0, 1, 1], [], []>} : vector<2x128xbf16>, vector<128x128xbf16>, vector<2x128xf32> -> vector<2x128xf32>
    %69 = arith.addf %65, %68 : vector<2x128xf32>
    %70 = vector.extract_strided_slice %36 {offsets = [16, 0], sizes = [2, 128], strides = [1, 1]} : vector<32x128xbf16> to vector<2x128xbf16>
    %c1024 = arith.constant 1024 : index
    %c0_35 = arith.constant 0 : index
    %71 = vector.load %arg5[%c1024, %c0_35] : memref<2048x128xbf16, #tpu.memory_space<vmem>>, vector<128x128xbf16>
    %cst_36 = arith.constant dense<0.000000e+00> : vector<2x128xf32>
    %72 = tpu.matmul %70, %71, %cst_36 {dimension_numbers = #tpu.dot_dimension_numbers<[1], [0], [0], [1], [0, 0, 1, 1], [], []>} : vector<2x128xbf16>, vector<128x128xbf16>, vector<2x128xf32> -> vector<2x128xf32>
    %73 = arith.addf %69, %72 : vector<2x128xf32>
    %74 = vector.extract_strided_slice %36 {offsets = [18, 0], sizes = [2, 128], strides = [1, 1]} : vector<32x128xbf16> to vector<2x128xbf16>
    %c1152 = arith.constant 1152 : index
    %c0_37 = arith.constant 0 : index
    %75 = vector.load %arg5[%c1152, %c0_37] : memref<2048x128xbf16, #tpu.memory_space<vmem>>, vector<128x128xbf16>
    %cst_38 = arith.constant dense<0.000000e+00> : vector<2x128xf32>
    %76 = tpu.matmul %74, %75, %cst_38 {dimension_numbers = #tpu.dot_dimension_numbers<[1], [0], [0], [1], [0, 0, 1, 1], [], []>} : vector<2x128xbf16>, vector<128x128xbf16>, vector<2x128xf32> -> vector<2x128xf32>
    %77 = arith.addf %73, %76 : vector<2x128xf32>
    %78 = vector.extract_strided_slice %36 {offsets = [20, 0], sizes = [2, 128], strides = [1, 1]} : vector<32x128xbf16> to vector<2x128xbf16>
    %c1280 = arith.constant 1280 : index
    %c0_39 = arith.constant 0 : index
    %79 = vector.load %arg5[%c1280, %c0_39] : memref<2048x128xbf16, #tpu.memory_space<vmem>>, vector<128x128xbf16>
    %cst_40 = arith.constant dense<0.000000e+00> : vector<2x128xf32>
    %80 = tpu.matmul %78, %79, %cst_40 {dimension_numbers = #tpu.dot_dimension_numbers<[1], [0], [0], [1], [0, 0, 1, 1], [], []>} : vector<2x128xbf16>, vector<128x128xbf16>, vector<2x128xf32> -> vector<2x128xf32>
    %81 = arith.addf %77, %80 : vector<2x128xf32>
    %82 = vector.extract_strided_slice %36 {offsets = [22, 0], sizes = [2, 128], strides = [1, 1]} : vector<32x128xbf16> to vector<2x128xbf16>
    %c1408 = arith.constant 1408 : index
    %c0_41 = arith.constant 0 : index
    %83 = vector.load %arg5[%c1408, %c0_41] : memref<2048x128xbf16, #tpu.memory_space<vmem>>, vector<128x128xbf16>
    %cst_42 = arith.constant dense<0.000000e+00> : vector<2x128xf32>
    %84 = tpu.matmul %82, %83, %cst_42 {dimension_numbers = #tpu.dot_dimension_numbers<[1], [0], [0], [1], [0, 0, 1, 1], [], []>} : vector<2x128xbf16>, vector<128x128xbf16>, vector<2x128xf32> -> vector<2x128xf32>
    %85 = arith.addf %81, %84 : vector<2x128xf32>
    %86 = vector.extract_strided_slice %36 {offsets = [24, 0], sizes = [2, 128], strides = [1, 1]} : vector<32x128xbf16> to vector<2x128xbf16>
    %c1536 = arith.constant 1536 : index
    %c0_43 = arith.constant 0 : index
    %87 = vector.load %arg5[%c1536, %c0_43] : memref<2048x128xbf16, #tpu.memory_space<vmem>>, vector<128x128xbf16>
    %cst_44 = arith.constant dense<0.000000e+00> : vector<2x128xf32>
    %88 = tpu.matmul %86, %87, %cst_44 {dimension_numbers = #tpu.dot_dimension_numbers<[1], [0], [0], [1], [0, 0, 1, 1], [], []>} : vector<2x128xbf16>, vector<128x128xbf16>, vector<2x128xf32> -> vector<2x128xf32>
    %89 = arith.addf %85, %88 : vector<2x128xf32>
    %90 = vector.extract_strided_slice %36 {offsets = [26, 0], sizes = [2, 128], strides = [1, 1]} : vector<32x128xbf16> to vector<2x128xbf16>
    %c1664 = arith.constant 1664 : index
    %c0_45 = arith.constant 0 : index
    %91 = vector.load %arg5[%c1664, %c0_45] : memref<2048x128xbf16, #tpu.memory_space<vmem>>, vector<128x128xbf16>
    %cst_46 = arith.constant dense<0.000000e+00> : vector<2x128xf32>
    %92 = tpu.matmul %90, %91, %cst_46 {dimension_numbers = #tpu.dot_dimension_numbers<[1], [0], [0], [1], [0, 0, 1, 1], [], []>} : vector<2x128xbf16>, vector<128x128xbf16>, vector<2x128xf32> -> vector<2x128xf32>
    %93 = arith.addf %89, %92 : vector<2x128xf32>
    %94 = vector.extract_strided_slice %36 {offsets = [28, 0], sizes = [2, 128], strides = [1, 1]} : vector<32x128xbf16> to vector<2x128xbf16>
    %c1792 = arith.constant 1792 : index
    %c0_47 = arith.constant 0 : index
    %95 = vector.load %arg5[%c1792, %c0_47] : memref<2048x128xbf16, #tpu.memory_space<vmem>>, vector<128x128xbf16>
    %cst_48 = arith.constant dense<0.000000e+00> : vector<2x128xf32>
    %96 = tpu.matmul %94, %95, %cst_48 {dimension_numbers = #tpu.dot_dimension_numbers<[1], [0], [0], [1], [0, 0, 1, 1], [], []>} : vector<2x128xbf16>, vector<128x128xbf16>, vector<2x128xf32> -> vector<2x128xf32>
    %97 = arith.addf %93, %96 : vector<2x128xf32>
    %98 = vector.extract_strided_slice %36 {offsets = [30, 0], sizes = [2, 128], strides = [1, 1]} : vector<32x128xbf16> to vector<2x128xbf16>
    %c1920 = arith.constant 1920 : index
    %c0_49 = arith.constant 0 : index
    %99 = vector.load %arg5[%c1920, %c0_49] : memref<2048x128xbf16, #tpu.memory_space<vmem>>, vector<128x128xbf16>
    %cst_50 = arith.constant dense<0.000000e+00> : vector<2x128xf32>
    %100 = tpu.matmul %98, %99, %cst_50 {dimension_numbers = #tpu.dot_dimension_numbers<[1], [0], [0], [1], [0, 0, 1, 1], [], []>} : vector<2x128xbf16>, vector<128x128xbf16>, vector<2x128xf32> -> vector<2x128xf32>
    %101 = arith.addf %97, %100 : vector<2x128xf32>
    %c0_51 = arith.constant 0 : index
    %c0_52 = arith.constant 0 : index
    %102 = vector.load %arg6[%c0_51, %c0_52] : memref<1x128xf32, #tpu.memory_space<vmem>>, vector<1x128xf32>
    %103 = vector.broadcast %102 : vector<1x128xf32> to vector<2x128xf32>
    %104 = arith.addf %101, %103 : vector<2x128xf32>
    %105 = tpu.iota {dimensions = array<i32: 1>} : vector<2x128xi32>
    %c0_i32 = arith.constant 0 : i32
    %106 = vector.broadcast %c0_i32 : i32 to vector<2x128xi32>
    %107 = arith.cmpi eq, %105, %106 : vector<2x128xi32>
    %cst_53 = arith.constant 0.000000e+00 : f32
    %108 = vector.broadcast %cst_53 : f32 to vector<2x128xf32>
    %109 = arith.subf %108, %104 : vector<2x128xf32>
    %110 = math.exp %109 : vector<2x128xf32>
    %cst_54 = arith.constant 1.000000e+00 : f32
    %111 = vector.broadcast %cst_54 : f32 to vector<2x128xf32>
    %112 = arith.addf %111, %110 : vector<2x128xf32>
    %cst_55 = arith.constant 1.000000e+00 : f32
    %113 = vector.broadcast %cst_55 : f32 to vector<2x128xf32>
    %114 = arith.divf %113, %112 : vector<2x128xf32>
    %115 = arith.select %107, %114, %104 : vector<2x128xi1>, vector<2x128xf32>
    %c3_i32 = arith.constant 3 : i32
    %116 = vector.broadcast %c3_i32 : i32 to vector<2x128xi32>
    %117 = arith.cmpi sge, %105, %116 : vector<2x128xi32>
    %c13_i32 = arith.constant 13 : i32
    %118 = vector.broadcast %c13_i32 : i32 to vector<2x128xi32>
    %119 = arith.cmpi slt, %105, %118 : vector<2x128xi32>
    %120 = arith.andi %117, %119 : vector<2x128xi1>
    %cst_56 = arith.constant 0xFF800000 : f32
    %121 = vector.broadcast %cst_56 : f32 to vector<2x128xf32>
    %122 = arith.select %120, %104, %121 : vector<2x128xi1>, vector<2x128xf32>
    %cst_57 = arith.constant dense<0xFF800000> : vector<2xf32>
    %123 = vector.multi_reduction <maximumf>, %122, %cst_57 [1] : vector<2x128xf32> to vector<2xf32>
    %124 = vector.shape_cast %123 : vector<2xf32> to vector<2x1xf32>
    %125 = vector.broadcast %124 : vector<2x1xf32> to vector<2x128xf32>
    %126 = arith.subf %122, %125 : vector<2x128xf32>
    %127 = math.exp %126 : vector<2x128xf32>
    %cst_58 = arith.constant 0.000000e+00 : f32
    %128 = vector.broadcast %cst_58 : f32 to vector<2x128xf32>
    %129 = arith.select %120, %127, %128 : vector<2x128xi1>, vector<2x128xf32>
    %cst_59 = arith.constant dense<0.000000e+00> : vector<2xf32>
    %130 = vector.multi_reduction <add>, %129, %cst_59 [1] : vector<2x128xf32> to vector<2xf32>
    %131 = vector.shape_cast %130 : vector<2xf32> to vector<2x1xf32>
    %132 = vector.broadcast %131 : vector<2x1xf32> to vector<2x128xf32>
    %133 = arith.divf %129, %132 : vector<2x128xf32>
    %134 = arith.select %120, %133, %115 : vector<2x128xi1>, vector<2x128xf32>
    %c0_60 = arith.constant 0 : index
    %c0_61 = arith.constant 0 : index
    %135 = vector.load %arg7[%c0_60, %c0_61] : memref<2x128xf32, #tpu.memory_space<vmem>>, vector<2x128xf32>
    tpu.vector_store %arg7[%c0_60, %c0_61], %134 {strides = array<i32>} : memref<2x128xf32, #tpu.memory_space<vmem>>, vector<2x128xf32>,
    return
  }
}

</mosaic_0001>

<llo_original>
// kernel: a_call__.3
$region0: #{a_call__.3}
  #allocation0 [shape = 'u32[]', space=smem, size = 0x4, offset = 0x4, fixed_abs, tag = 'smem constant byte address 0x4 - core index']
  #allocation1 [shape = 'u32[72,128]{1,0:T(1,128)}', space=vmem, size = 0x9000, scoped, tag = 'internal scratch']
  %s0 = inlined_call_operand.vmem [shape: bf16[512,128], index: 0, kind: input, shape index: {}]
  %s1 = inlined_call_operand.vmem [shape: bf16[128,128], index: 1, kind: input, shape index: {}]
  %s2 = inlined_call_operand.vmem [shape: f32[1,128], index: 2, kind: input, shape index: {}]
  %s3 = inlined_call_operand.vmem [shape: bf16[512,128], index: 3, kind: output, shape index: {}]
  %s4 = sld [smem:[#allocation0]]
  $region45: #{a_call__.3} parent=0
    _
  %s6 = ssub.s32 1, %s4
  %s7 = scalar_select 0, %s6, %s4
  loop: start=0, step=1, limit=4
  $region2: #{a_call__.3} parent=0 // loop_pre_header
    _
  $region3: #{a_call__.3} parent=0 // loop_header
    %s9 = sphi 0, %s13
    %p10 = scmp.ge.s32.totalorder %s9, 4
    %s19 = sphi 0, %s21
    %s22 = sphi 0, %s19
    %s23 = sphi 0, %s22
    %s39 = sphi 0, %s23
    %s43 = sphi 0, %s43
    %s45 = sphi 0, %s43
    %s46 = sphi 0, %s45
    %s60 = sphi 0, %s46
    %s64 = sphi 0, %s64
    %s66 = sphi 0, %s64
    %s67 = sphi 0, %s66
    %s81 = sphi 0, %s67
    %s87 = sphi 0, %s89
    %s90 = sphi 0, %s87
    %s91 = sphi 0, %s90
    %s107 = sphi 0, %s91
  $region4: #{a_call__.3} parent=0 // loop_header_branch
    %12 = sbr.rel (%p10) target = $region8
  $region5: #{a_call__.3} parent=0 // loop_body
    %s14 = ssub.s32 %s9, 1
    %s15 = ssub.s32 %s9, 2
    %s16 = sadd.s32 %s9, 1
    %s17 = ssub.s32 %s9, %s16
    %p18 = scmp.eq.s32.totalorder %s17, 0
    %s20 = sadd.s32 %s19, 1
    %s21 = scalar_select %p18, %s19, %s20
    %p24 = pneg %p18
    %p25 = scmp.eq.s32.totalorder %s9, 1
    %p26 = por %p24, %p25
    %p27 = scmp.ne.s32.totalorder %s19, %s22
    %p28 = scmp.eq.s32.totalorder %s9, 0
    %p29 = por %p27, %p28
    %p30 = scmp.ne.s32.totalorder %s19, %s22
    %p31 = scmp.eq.s32.totalorder %s14, 1
    %p32 = por %p30, %p31
    %p33 = scmp.ne.s32.totalorder %s22, %s23
    %p34 = scmp.eq.s32.totalorder %s14, 0
    %p35 = por %p33, %p34
    %p36 = scmp.ne.s32.totalorder %s22, %s23
    %p37 = scmp.eq.s32.totalorder %s15, 1
    %p38 = por %p36, %p37
    %p40 = scmp.ne.s32.totalorder %s23, %s39
    %p41 = scmp.eq.s32.totalorder %s15, 0
    %p42 = por %p40, %p41
    %s44 = sadd.s32 %s43, 1
    %p47 = scmp.eq.s32.totalorder %s9, 1
    %p48 = scmp.ne.s32.totalorder %s43, %s45
    %p49 = scmp.eq.s32.totalorder %s9, 0
    %p50 = por %p48, %p49
    %p51 = scmp.ne.s32.totalorder %s43, %s45
    %p52 = scmp.eq.s32.totalorder %s14, 1
    %p53 = por %p51, %p52
    %p54 = scmp.ne.s32.totalorder %s45, %s46
    %p55 = scmp.eq.s32.totalorder %s14, 0
    %p56 = por %p54, %p55
    %p57 = scmp.ne.s32.totalorder %s45, %s46
    %p58 = scmp.eq.s32.totalorder %s15, 1
    %p59 = por %p57, %p58
    %p61 = scmp.ne.s32.totalorder %s46, %s60
    %p62 = scmp.eq.s32.totalorder %s15, 0
    %p63 = por %p61, %p62
    %s65 = sadd.s32 %s64, 1
    %p68 = scmp.eq.s32.totalorder %s9, 1
    %p69 = scmp.ne.s32.totalorder %s64, %s66
    %p70 = scmp.eq.s32.totalorder %s9, 0
    %p71 = por %p69, %p70
    %p72 = scmp.ne.s32.totalorder %s64, %s66
    %p73 = scmp.eq.s32.totalorder %s14, 1
    %p74 = por %p72, %p73
    %p75 = scmp.ne.s32.totalorder %s66, %s67
    %p76 = scmp.eq.s32.totalorder %s14, 0
    %p77 = por %p75, %p76
    %p78 = scmp.ne.s32.totalorder %s66, %s67
    %p79 = scmp.eq.s32.totalorder %s15, 1
    %p80 = por %p78, %p79
    %p82 = scmp.ne.s32.totalorder %s67, %s81
    %p83 = scmp.eq.s32.totalorder %s15, 0
    %p84 = por %p82, %p83
    %s85 = ssub.s32 %s9, %s16
    %p86 = scmp.eq.s32.totalorder %s85, 0
    %s88 = sadd.s32 %s87, 1
    %s89 = scalar_select %p86, %s87, %s88
    %p92 = pneg %p86
    %p93 = scmp.eq.s32.totalorder %s9, 1
    %p94 = por %p92, %p93
    %p95 = scmp.ne.s32.totalorder %s87, %s90
    %p96 = scmp.eq.s32.totalorder %s9, 0
    %p97 = por %p95, %p96
    %p98 = scmp.ne.s32.totalorder %s87, %s90
    %p99 = scmp.eq.s32.totalorder %s14, 1
    %p100 = por %p98, %p99
    %p101 = scmp.ne.s32.totalorder %s90, %s91
    %p102 = scmp.eq.s32.totalorder %s14, 0
    %p103 = por %p101, %p102
    %p104 = scmp.ne.s32.totalorder %s90, %s91
    %p105 = scmp.eq.s32.totalorder %s15, 1
    %p106 = por %p104, %p105
    %p108 = scmp.ne.s32.totalorder %s91, %s107
    %p109 = scmp.eq.s32.totalorder %s15, 0
    %p110 = por %p108, %p109
    %p111 = scmp.le.s32.totalorder 1, %s9
    %p112 = scmp.lt.s32.totalorder %s9, 3
    %p113 = pnand %p111, %p112
    %p114 = pneg %p113
    // Predicated region
    $region9: #{a_call__.3} parent=5 // pred_check
      _
    $region10: #{a_call__.3} parent=5 // pred_check_branch
      %116 = sbr.rel (%p113) target = $region12
    $region11: #{a_call__.3} parent=5 // pred_region
      %s117 = ssub.s32 %s9, 1
      // Predicated region
      $region13: #{a_call__.3} parent=11 // pred_check
        %p118 = pneg %p56
      $region14: #{a_call__.3} parent=11 // pred_check_branch
        %120 = sbr.rel (%p118) target = $region16
      $region15: #{a_call__.3} parent=11 // pred_region
        _
      $region16: #{a_call__.3} parent=11 // pred_fallthru
        _
      // Predicated region
      $region17: #{a_call__.3} parent=11 // pred_check
        %p121 = pneg %p77
      $region18: #{a_call__.3} parent=11 // pred_check_branch
        %123 = sbr.rel (%p121) target = $region20
      $region19: #{a_call__.3} parent=11 // pred_region
        _
      $region20: #{a_call__.3} parent=11 // pred_fallthru
        _
    $region12: #{a_call__.3} parent=5 // pred_fallthru
      _
    %p124 = scmp.lt.s32.totalorder %s9, 2
    // Predicated region
    $region21: #{a_call__.3} parent=5 // pred_check
      %p125 = pneg %p124
    $region22: #{a_call__.3} parent=5 // pred_check_branch
      %127 = sbr.rel (%p125) target = $region24
    $region23: #{a_call__.3} parent=5 // pred_region
      // Predicated region
      $region25: #{a_call__.3} parent=23 // pred_check
        %p128 = pneg %p29
      $region26: #{a_call__.3} parent=23 // pred_check_branch
        %130 = sbr.rel (%p128) target = $region28
      $region27: #{a_call__.3} parent=23 // pred_region
        %s131 = smul.u32 32, %s9
        %p132 = scmp.lt.s32.totalorder %s131, 63
        %s133 = scalar_select %p132, %s131, 63
        %s134 = smul.addr %s133, 4
        %s135 = scalar_lea.vmem %s0, %s134
        %s136 = smul.u32 32, %s9
      $region28: #{a_call__.3} parent=23 // pred_fallthru
        _
    $region24: #{a_call__.3} parent=5 // pred_fallthru
      _
    %p137 = scmp.le.s32.totalorder 1, %s9
    %p138 = scmp.lt.s32.totalorder %s9, 3
    %p139 = pnand %p137, %p138
    %p140 = pneg %p139
    // Predicated region
    $region29: #{a_call__.3} parent=5 // pred_check
      _
    $region30: #{a_call__.3} parent=5 // pred_check_branch
      %142 = sbr.rel (%p139) target = $region32
    $region31: #{a_call__.3} parent=5 // pred_region
      %s143 = ssub.s32 %s9, 1
      %s144 = smul.u32 32, %s14
      %p145 = scmp.lt.s32.totalorder %s144, 63
      %s146 = scalar_select %p145, %s144, 63
      %s147 = smul.addr %s146, 4
      %s148 = scalar_lea.vmem %s0, %s147
      %p149 = pneg %p35
      %p150 = pneg %p32
      %p151 = pneg %p56
      %p152 = pneg %p53
      %p153 = pneg %p77
      %p154 = pneg %p74
      %p155 = pneg %p103
      %p156 = pneg %p100
      %s157 = smul.u32 32, %s14
      %p158 = scmp.lt.s32.totalorder %s157, 63
      %s159 = scalar_select %p158, %s157, 63
      %s160 = smul.addr %s159, 4
      %s161 = scalar_lea.vmem %s3, %s160
      %s162 = smul.u32 32, %s14
      %p163 = scmp.lt.s32.totalorder %s162, 63
      %s164 = scalar_select %p163, %s162, 63
      %s165 = smul.addr %s164, 4
      %s166 = scalar_lea.vmem %s0, %s165
      %s167 = smul.u32 32, %s14
      %s168 = smul.u32 32, %s14
      %p169 = scmp.lt.s32.totalorder %s168, 63
      %s170 = scalar_select %p169, %s168, 63
      %s171 = smul.addr %s170, 4
      %s172 = scalar_lea.vmem %s3, %s171
      %s173 = smul.u32 32, %s14
      %v174 = vld [vmem:[%s166] sm:$0xf]
      %v175 = vld [vmem:[%s166 + $0x4] sm:$0xf]
      %v176 = vld [vmem:[%s166 + $0x8] sm:$0xf]
      %v177 = vld [vmem:[%s166 + $0xc] sm:$0xf]
      %v178 = vld [vmem:[%s166 + $0x10] sm:$0xf]
      %v179 = vld [vmem:[%s166 + $0x14] sm:$0xf]
      %v180 = vld [vmem:[%s166 + $0x18] sm:$0xf]
      %v181 = vld [vmem:[%s166 + $0x1c] sm:$0xf]
      %v182 = vld [vmem:[%s166 + $0x20] sm:$0xf]
      %v183 = vld [vmem:[%s166 + $0x24] sm:$0xf]
      %v184 = vld [vmem:[%s166 + $0x28] sm:$0xf]
      %v185 = vld [vmem:[%s166 + $0x2c] sm:$0xf]
      %v186 = vld [vmem:[%s166 + $0x30] sm:$0xf]
      %v187 = vld [vmem:[%s166 + $0x34] sm:$0xf]
      %v188 = vld [vmem:[%s166 + $0x38] sm:$0xf]
      %v189 = vld [vmem:[%s166 + $0x3c] sm:$0xf]
      %v190 = vld [vmem:[%s166 + $0x40] sm:$0xf]
      %v191 = vld [vmem:[%s166 + $0x44] sm:$0xf]
      %v192 = vld [vmem:[%s166 + $0x48] sm:$0xf]
      %v193 = vld [vmem:[%s166 + $0x4c] sm:$0xf]
      %v194 = vld [vmem:[%s166 + $0x50] sm:$0xf]
      %v195 = vld [vmem:[%s166 + $0x54] sm:$0xf]
      %v196 = vld [vmem:[%s166 + $0x58] sm:$0xf]
      %v197 = vld [vmem:[%s166 + $0x5c] sm:$0xf]
      %v198 = vld [vmem:[%s166 + $0x60] sm:$0xf]
      %v199 = vld [vmem:[%s166 + $0x64] sm:$0xf]
      %v200 = vld [vmem:[%s166 + $0x68] sm:$0xf]
      %v201 = vld [vmem:[%s166 + $0x6c] sm:$0xf]
      %v202 = vld [vmem:[%s166 + $0x70] sm:$0xf]
      %v203 = vld [vmem:[%s166 + $0x74] sm:$0xf]
      %v204 = vld [vmem:[%s166 + $0x78] sm:$0xf]
      %v205 = vld [vmem:[%s166 + $0x7c] sm:$0xf]
      %v206 = vld [vmem:[%s1] sm:$0xf]
      %v207 = vld [vmem:[%s1 + $0x4] sm:$0xf]
      %v208 = vld [vmem:[%s1 + $0x8] sm:$0xf]
      %v209 = vld [vmem:[%s1 + $0xc] sm:$0xf]
      %v210 = vld [vmem:[%s1 + $0x10] sm:$0xf]
      %v211 = vld [vmem:[%s1 + $0x14] sm:$0xf]
      %v212 = vld [vmem:[%s1 + $0x18] sm:$0xf]
      %v213 = vld [vmem:[%s1 + $0x1c] sm:$0xf]
      %v214 = vld [vmem:[%s1 + $0x20] sm:$0xf]
      %v215 = vld [vmem:[%s1 + $0x24] sm:$0xf]
      %v216 = vld [vmem:[%s1 + $0x28] sm:$0xf]
      %v217 = vld [vmem:[%s1 + $0x2c] sm:$0xf]
      %v218 = vld [vmem:[%s1 + $0x30] sm:$0xf]
      %v219 = vld [vmem:[%s1 + $0x34] sm:$0xf]
      %v220 = vld [vmem:[%s1 + $0x38] sm:$0xf]
      %v221 = vld [vmem:[%s1 + $0x3c] sm:$0xf]
      %v222 = vld [vmem:[%s2] sm:$0x1]
      %v224 = vperm.slane %v222, 0
      %v258 = vunpack.c.l.b16 %v174
      %v259 = vunpack.c.l.b16 %v175
      %v260 = vunpack.c.l.b16 %v176
      %v261 = vunpack.c.l.b16 %v177
      %v262 = vunpack.c.l.b16 %v178
      %v263 = vunpack.c.l.b16 %v179
      %v264 = vunpack.c.l.b16 %v180
      %v265 = vunpack.c.l.b16 %v181
      %v266 = vunpack.c.l.b16 %v182
      %v267 = vunpack.c.l.b16 %v183
      %v268 = vunpack.c.l.b16 %v184
      %v269 = vunpack.c.l.b16 %v185
      %v270 = vunpack.c.l.b16 %v186
      %v271 = vunpack.c.l.b16 %v187
      %v272 = vunpack.c.l.b16 %v188
      %v273 = vunpack.c.l.b16 %v189
      %v274 = vunpack.c.l.b16 %v190
      %v275 = vunpack.c.l.b16 %v191
      %v276 = vunpack.c.l.b16 %v192
      %v277 = vunpack.c.l.b16 %v193
      %v278 = vunpack.c.l.b16 %v194
      %v279 = vunpack.c.l.b16 %v195
      %v280 = vunpack.c.l.b16 %v196
      %v281 = vunpack.c.l.b16 %v197
      %v282 = vunpack.c.l.b16 %v198
      %v283 = vunpack.c.l.b16 %v199
      %v284 = vunpack.c.l.b16 %v200
      %v285 = vunpack.c.l.b16 %v201
      %v286 = vunpack.c.l.b16 %v202
      %v287 = vunpack.c.l.b16 %v203
      %v288 = vunpack.c.l.b16 %v204
      %v289 = vunpack.c.l.b16 %v205
      %v290 = vpack.c.b16 %v259, %v258
      %v291 = vpack.c.b16 %v261, %v260
      %v292 = vpack.c.b16 %v263, %v262
      %v293 = vpack.c.b16 %v265, %v264
      %v294 = vpack.c.b16 %v267, %v266
      %v295 = vpack.c.b16 %v269, %v268
      %v296 = vpack.c.b16 %v271, %v270
      %v297 = vpack.c.b16 %v273, %v272
      %v298 = vpack.c.b16 %v275, %v274
      %v299 = vpack.c.b16 %v277, %v276
      %v300 = vpack.c.b16 %v279, %v278
      %v301 = vpack.c.b16 %v281, %v280
      %v302 = vpack.c.b16 %v283, %v282
      %v303 = vpack.c.b16 %v285, %v284
      %v304 = vpack.c.b16 %v287, %v286
      %v305 = vpack.c.b16 %v289, %v288
      %v338 = vunpack.c.l.b16 %v206
      %v339 = vunpack.c.l.b16 %v207
      %v340 = vunpack.c.l.b16 %v208
      %v341 = vunpack.c.l.b16 %v209
      %v342 = vunpack.c.l.b16 %v210
      %v343 = vunpack.c.l.b16 %v211
      %v344 = vunpack.c.l.b16 %v212
      %v345 = vunpack.c.l.b16 %v213
      %v346 = vunpack.c.l.b16 %v214
      %v347 = vunpack.c.l.b16 %v215
      %v348 = vunpack.c.l.b16 %v216
      %v349 = vunpack.c.l.b16 %v217
      %v350 = vunpack.c.l.b16 %v218
      %v351 = vunpack.c.l.b16 %v219
      %v352 = vunpack.c.l.b16 %v220
      %v353 = vunpack.c.l.b16 %v221
      %v354 = vpack.c.b16 %v339, %v338
      %v355 = vpack.c.b16 %v341, %v340
      %v356 = vpack.c.b16 %v343, %v342
      %v357 = vpack.c.b16 %v345, %v344
      %v358 = vpack.c.b16 %v347, %v346
      %v359 = vpack.c.b16 %v349, %v348
      %v360 = vpack.c.b16 %v351, %v350
      %v361 = vpack.c.b16 %v353, %v352
      %370 = vmatpush.bf16.msra.mxu0 %v361
      %371 = vmatpush.bf16.msra.mxu0 %v360
      %372 = vmatpush.bf16.msra.mxu0 %v359
      %373 = vmatpush.bf16.msra.mxu0 %v358
      %374 = vmatpush.bf16.msra.mxu0 %v357
      %375 = vmatpush.bf16.msra.mxu0 %v356
      %376 = vmatpush.bf16.msra.mxu0 %v355
      %377 = vmatpush.bf16.msra.mxu0 %v354
      %378 = vmatmul.bf16.gmra.mxu0 %v290
      %v379 = vpop.f32.mrf.mxu0
      %v380 = vadd.f32 %v224, %v379
      %v381 = vpop.f32.mrf.mxu0
      %v382 = vadd.f32 %v224, %v381
      %383 = vmatmul.bf16.gmra.mxu0 %v291
      %v384 = vpop.f32.mrf.mxu0
      %v385 = vadd.f32 %v224, %v384
      %v386 = vpop.f32.mrf.mxu0
      %v387 = vadd.f32 %v224, %v386
      %388 = vmatmul.bf16.gmra.mxu0 %v292
      %v389 = vpop.f32.mrf.mxu0
      %v390 = vadd.f32 %v224, %v389
      %v391 = vpop.f32.mrf.mxu0
      %v392 = vadd.f32 %v224, %v391
      %393 = vmatmul.bf16.gmra.mxu0 %v293
      %v394 = vpop.f32.mrf.mxu0
      %v395 = vadd.f32 %v224, %v394
      %v396 = vpop.f32.mrf.mxu0
      %v397 = vadd.f32 %v224, %v396
      %398 = vmatmul.bf16.gmra.mxu0 %v294
      %v399 = vpop.f32.mrf.mxu0
      %v400 = vadd.f32 %v224, %v399
      %v401 = vpop.f32.mrf.mxu0
      %v402 = vadd.f32 %v224, %v401
      %403 = vmatmul.bf16.gmra.mxu0 %v295
      %v404 = vpop.f32.mrf.mxu0
      %v405 = vadd.f32 %v224, %v404
      %v406 = vpop.f32.mrf.mxu0
      %v407 = vadd.f32 %v224, %v406
      %408 = vmatmul.bf16.gmra.mxu0 %v296
      %v409 = vpop.f32.mrf.mxu0
      %v410 = vadd.f32 %v224, %v409
      %v411 = vpop.f32.mrf.mxu0
      %v412 = vadd.f32 %v224, %v411
      %413 = vmatmul.bf16.gmra.mxu0 %v297
      %v414 = vpop.f32.mrf.mxu0
      %v415 = vadd.f32 %v224, %v414
      %v416 = vpop.f32.mrf.mxu0
      %v417 = vadd.f32 %v224, %v416
      %418 = vmatmul.bf16.gmra.mxu0 %v298
      %v419 = vpop.f32.mrf.mxu0
      %v420 = vadd.f32 %v224, %v419
      %v421 = vpop.f32.mrf.mxu0
      %v422 = vadd.f32 %v224, %v421
      %423 = vmatmul.bf16.gmra.mxu0 %v299
      %v424 = vpop.f32.mrf.mxu0
      %v425 = vadd.f32 %v224, %v424
      %v426 = vpop.f32.mrf.mxu0
      %v427 = vadd.f32 %v224, %v426
      %428 = vmatmul.bf16.gmra.mxu0 %v300
      %v429 = vpop.f32.mrf.mxu0
      %v430 = vadd.f32 %v224, %v429
      %v431 = vpop.f32.mrf.mxu0
      %v432 = vadd.f32 %v224, %v431
      %433 = vmatmul.bf16.gmra.mxu0 %v301
      %v434 = vpop.f32.mrf.mxu0
      %v435 = vadd.f32 %v224, %v434
      %v436 = vpop.f32.mrf.mxu0
      %v437 = vadd.f32 %v224, %v436
      %438 = vmatmul.bf16.gmra.mxu0 %v302
      %v439 = vpop.f32.mrf.mxu0
      %v440 = vadd.f32 %v224, %v439
      %v441 = vpop.f32.mrf.mxu0
      %v442 = vadd.f32 %v224, %v441
      %443 = vmatmul.bf16.gmra.mxu0 %v303
      %v444 = vpop.f32.mrf.mxu0
      %v445 = vadd.f32 %v224, %v444
      %v446 = vpop.f32.mrf.mxu0
      %v447 = vadd.f32 %v224, %v446
      %448 = vmatmul.bf16.gmra.mxu0 %v304
      %v449 = vpop.f32.mrf.mxu0
      %v450 = vadd.f32 %v224, %v449
      %v451 = vpop.f32.mrf.mxu0
      %v452 = vadd.f32 %v224, %v451
      %453 = vmatmul.bf16.gmra.mxu0 %v305
      %v454 = vpop.f32.mrf.mxu0
      %v455 = vadd.f32 %v224, %v454
      %v456 = vpop.f32.mrf.mxu0
      %v457 = vadd.f32 %v224, %v456
      %458 = vdwg.mxu0
      %vm459 = vcmp.gt.f32.partialorder %v380, 0.0
      %vm460 = vcmp.gt.f32.partialorder %v382, 0.0
      %vm461 = vcmp.gt.f32.partialorder %v385, 0.0
      %vm462 = vcmp.gt.f32.partialorder %v387, 0.0
      %vm463 = vcmp.gt.f32.partialorder %v390, 0.0
      %vm464 = vcmp.gt.f32.partialorder %v392, 0.0
      %vm465 = vcmp.gt.f32.partialorder %v395, 0.0
      %vm466 = vcmp.gt.f32.partialorder %v397, 0.0
      %vm467 = vcmp.gt.f32.partialorder %v400, 0.0
      %vm468 = vcmp.gt.f32.partialorder %v402, 0.0
      %vm469 = vcmp.gt.f32.partialorder %v405, 0.0
      %vm470 = vcmp.gt.f32.partialorder %v407, 0.0
      %vm471 = vcmp.gt.f32.partialorder %v410, 0.0
      %vm472 = vcmp.gt.f32.partialorder %v412, 0.0
      %vm473 = vcmp.gt.f32.partialorder %v415, 0.0
      %vm474 = vcmp.gt.f32.partialorder %v417, 0.0
      %vm475 = vcmp.gt.f32.partialorder %v420, 0.0
      %vm476 = vcmp.gt.f32.partialorder %v422, 0.0
      %vm477 = vcmp.gt.f32.partialorder %v425, 0.0
      %vm478 = vcmp.gt.f32.partialorder %v427, 0.0
      %vm479 = vcmp.gt.f32.partialorder %v430, 0.0
      %vm480 = vcmp.gt.f32.partialorder %v432, 0.0
      %vm481 = vcmp.gt.f32.partialorder %v435, 0.0
      %vm482 = vcmp.gt.f32.partialorder %v437, 0.0
      %vm483 = vcmp.gt.f32.partialorder %v440, 0.0
      %vm484 = vcmp.gt.f32.partialorder %v442, 0.0
      %vm485 = vcmp.gt.f32.partialorder %v445, 0.0
      %vm486 = vcmp.gt.f32.partialorder %v447, 0.0
      %vm487 = vcmp.gt.f32.partialorder %v450, 0.0
      %vm488 = vcmp.gt.f32.partialorder %v452, 0.0
      %vm489 = vcmp.gt.f32.partialorder %v455, 0.0
      %vm490 = vcmp.gt.f32.partialorder %v457, 0.0
      %v491 = vmul.f32 %v380, 0.2
      %v492 = vmul.f32 %v382, 0.2
      %v493 = vmul.f32 %v385, 0.2
      %v494 = vmul.f32 %v387, 0.2
      %v495 = vmul.f32 %v390, 0.2
      %v496 = vmul.f32 %v392, 0.2
      %v497 = vmul.f32 %v395, 0.2
      %v498 = vmul.f32 %v397, 0.2
      %v499 = vmul.f32 %v400, 0.2
      %v500 = vmul.f32 %v402, 0.2
      %v501 = vmul.f32 %v405, 0.2
      %v502 = vmul.f32 %v407, 0.2
      %v503 = vmul.f32 %v410, 0.2
      %v504 = vmul.f32 %v412, 0.2
      %v505 = vmul.f32 %v415, 0.2
      %v506 = vmul.f32 %v417, 0.2
      %v507 = vmul.f32 %v420, 0.2
      %v508 = vmul.f32 %v422, 0.2
      %v509 = vmul.f32 %v425, 0.2
      %v510 = vmul.f32 %v427, 0.2
      %v511 = vmul.f32 %v430, 0.2
      %v512 = vmul.f32 %v432, 0.2
      %v513 = vmul.f32 %v435, 0.2
      %v514 = vmul.f32 %v437, 0.2
      %v515 = vmul.f32 %v440, 0.2
      %v516 = vmul.f32 %v442, 0.2
      %v517 = vmul.f32 %v445, 0.2
      %v518 = vmul.f32 %v447, 0.2
      %v519 = vmul.f32 %v450, 0.2
      %v520 = vmul.f32 %v452, 0.2
      %v521 = vmul.f32 %v455, 0.2
      %v522 = vmul.f32 %v457, 0.2
      %v523 = vsel %vm459, %v380, %v491
      %v524 = vsel %vm460, %v382, %v492
      %v525 = vsel %vm461, %v385, %v493
      %v526 = vsel %vm462, %v387, %v494
      %v527 = vsel %vm463, %v390, %v495
      %v528 = vsel %vm464, %v392, %v496
      %v529 = vsel %vm465, %v395, %v497
      %v530 = vsel %vm466, %v397, %v498
      %v531 = vsel %vm467, %v400, %v499
      %v532 = vsel %vm468, %v402, %v500
      %v533 = vsel %vm469, %v405, %v501
      %v534 = vsel %vm470, %v407, %v502
      %v535 = vsel %vm471, %v410, %v503
      %v536 = vsel %vm472, %v412, %v504
      %v537 = vsel %vm473, %v415, %v505
      %v538 = vsel %vm474, %v417, %v506
      %v539 = vsel %vm475, %v420, %v507
      %v540 = vsel %vm476, %v422, %v508
      %v541 = vsel %vm477, %v425, %v509
      %v542 = vsel %vm478, %v427, %v510
      %v543 = vsel %vm479, %v430, %v511
      %v544 = vsel %vm480, %v432, %v512
      %v545 = vsel %vm481, %v435, %v513
      %v546 = vsel %vm482, %v437, %v514
      %v547 = vsel %vm483, %v440, %v515
      %v548 = vsel %vm484, %v442, %v516
      %v549 = vsel %vm485, %v445, %v517
      %v550 = vsel %vm486, %v447, %v518
      %v551 = vsel %vm487, %v450, %v519
      %v552 = vsel %vm488, %v452, %v520
      %v553 = vsel %vm489, %v455, %v521
      %v554 = vsel %vm490, %v457, %v522
      %v555 = vpack.c.bf16 %v523, %v523
      %v556 = vpack.c.bf16 %v524, %v524
      %v557 = vpack.c.bf16 %v525, %v525
      %v558 = vpack.c.bf16 %v526, %v526
      %v559 = vpack.c.bf16 %v527, %v527
      %v560 = vpack.c.bf16 %v528, %v528
      %v561 = vpack.c.bf16 %v529, %v529
      %v562 = vpack.c.bf16 %v530, %v530
      %v563 = vpack.c.bf16 %v531, %v531
      %v564 = vpack.c.bf16 %v532, %v532
      %v565 = vpack.c.bf16 %v533, %v533
      %v566 = vpack.c.bf16 %v534, %v534
      %v567 = vpack.c.bf16 %v535, %v535
      %v568 = vpack.c.bf16 %v536, %v536
      %v569 = vpack.c.bf16 %v537, %v537
      %v570 = vpack.c.bf16 %v538, %v538
      %v571 = vpack.c.bf16 %v539, %v539
      %v572 = vpack.c.bf16 %v540, %v540
      %v573 = vpack.c.bf16 %v541, %v541
      %v574 = vpack.c.bf16 %v542, %v542
      %v575 = vpack.c.bf16 %v543, %v543
      %v576 = vpack.c.bf16 %v544, %v544
      %v577 = vpack.c.bf16 %v545, %v545
      %v578 = vpack.c.bf16 %v546, %v546
      %v579 = vpack.c.bf16 %v547, %v547
      %v580 = vpack.c.bf16 %v548, %v548
      %v581 = vpack.c.bf16 %v549, %v549
      %v582 = vpack.c.bf16 %v550, %v550
      %v583 = vpack.c.bf16 %v551, %v551
      %v584 = vpack.c.bf16 %v552, %v552
      %v585 = vpack.c.bf16 %v553, %v553
      %v586 = vpack.c.bf16 %v554, %v554
      %587 = vst [vmem:[%s172] sm:$0xf] %v555
      %588 = vst [vmem:[%s172 + $0x4] sm:$0xf] %v556
      %589 = vst [vmem:[%s172 + $0x8] sm:$0xf] %v557
      %590 = vst [vmem:[%s172 + $0xc] sm:$0xf] %v558
      %591 = vst [vmem:[%s172 + $0x10] sm:$0xf] %v559
      %592 = vst [vmem:[%s172 + $0x14] sm:$0xf] %v560
      %593 = vst [vmem:[%s172 + $0x18] sm:$0xf] %v561
      %594 = vst [vmem:[%s172 + $0x1c] sm:$0xf] %v562
      %595 = vst [vmem:[%s172 + $0x20] sm:$0xf] %v563
      %596 = vst [vmem:[%s172 + $0x24] sm:$0xf] %v564
      %597 = vst [vmem:[%s172 + $0x28] sm:$0xf] %v565
      %598 = vst [vmem:[%s172 + $0x2c] sm:$0xf] %v566
      %599 = vst [vmem:[%s172 + $0x30] sm:$0xf] %v567
      %600 = vst [vmem:[%s172 + $0x34] sm:$0xf] %v568
      %601 = vst [vmem:[%s172 + $0x38] sm:$0xf] %v569
      %602 = vst [vmem:[%s172 + $0x3c] sm:$0xf] %v570
      %603 = vst [vmem:[%s172 + $0x40] sm:$0xf] %v571
      %604 = vst [vmem:[%s172 + $0x44] sm:$0xf] %v572
      %605 = vst [vmem:[%s172 + $0x48] sm:$0xf] %v573
      %606 = vst [vmem:[%s172 + $0x4c] sm:$0xf] %v574
      %607 = vst [vmem:[%s172 + $0x50] sm:$0xf] %v575
      %608 = vst [vmem:[%s172 + $0x54] sm:$0xf] %v576
      %609 = vst [vmem:[%s172 + $0x58] sm:$0xf] %v577
      %610 = vst [vmem:[%s172 + $0x5c] sm:$0xf] %v578
      %611 = vst [vmem:[%s172 + $0x60] sm:$0xf] %v579
      %612 = vst [vmem:[%s172 + $0x64] sm:$0xf] %v580
      %613 = vst [vmem:[%s172 + $0x68] sm:$0xf] %v581
      %614 = vst [vmem:[%s172 + $0x6c] sm:$0xf] %v582
      %615 = vst [vmem:[%s172 + $0x70] sm:$0xf] %v583
      %616 = vst [vmem:[%s172 + $0x74] sm:$0xf] %v584
      %617 = vst [vmem:[%s172 + $0x78] sm:$0xf] %v585
      %618 = vst [vmem:[%s172 + $0x7c] sm:$0xf] %v586
      %s619 = smul.u32 32, %s14
      %p620 = scmp.lt.s32.totalorder %s619, 63
      %s621 = scalar_select %p620, %s619, 63
      %s622 = smul.addr %s621, 4
      %s623 = scalar_lea.vmem %s3, %s622
      // Predicated region
      $region33: #{a_call__.3} parent=31 // pred_check
        %p624 = pneg %p100
      $region34: #{a_call__.3} parent=31 // pred_check_branch
        %626 = sbr.rel (%p624) target = $region36
      $region35: #{a_call__.3} parent=31 // pred_region
        %s627 = smul.u32 32, %s14
      $region36: #{a_call__.3} parent=31 // pred_fallthru
        _
    $region32: #{a_call__.3} parent=5 // pred_fallthru
      _
    %p628 = scmp.le.s32.totalorder 2, %s9
    // Predicated region
    $region37: #{a_call__.3} parent=5 // pred_check
      %p629 = pneg %p628
    $region38: #{a_call__.3} parent=5 // pred_check_branch
      %631 = sbr.rel (%p629) target = $region40
    $region39: #{a_call__.3} parent=5 // pred_region
      %s632 = ssub.s32 %s9, 2
      // Predicated region
      $region41: #{a_call__.3} parent=39 // pred_check
        %p633 = pneg %p106
      $region42: #{a_call__.3} parent=39 // pred_check_branch
        %635 = sbr.rel (%p633) target = $region44
      $region43: #{a_call__.3} parent=39 // pred_region
        %s636 = smul.u32 32, %s15
        %p637 = scmp.lt.s32.totalorder %s636, 63
        %s638 = scalar_select %p637, %s636, 63
        %s639 = smul.addr %s638, 4
        %s640 = scalar_lea.vmem %s3, %s639
      $region44: #{a_call__.3} parent=39 // pred_fallthru
        _
    $region40: #{a_call__.3} parent=5 // pred_fallthru
      _
  $region6: #{a_call__.3} parent=0 // loop_footer
    %s13 = sadd.s32 1, %s9
  $region7: #{a_call__.3} parent=0 // loop_footer_branch
    %8 = sbr.rel target = $region3
  $region8: #{a_call__.3} parent=0 // loop_exit
    _

// kernel: a_call__.4
$region0: #{a_call__.4}
  #allocation0 [shape = 'u32[]', space=smem, size = 0x4, offset = 0x4, fixed_abs, tag = 'smem constant byte address 0x4 - core index']
  #allocation1 [shape = 'u32[72,128]{1,0:T(1,128)}', space=vmem, size = 0x9000, scoped, tag = 'internal scratch']
  %s0 = inlined_call_operand.vmem [shape: bf16[128,256], index: 0, kind: input, shape index: {}]
  %s1 = inlined_call_operand.vmem [shape: bf16[256,128], index: 1, kind: input, shape index: {}]
  %s2 = inlined_call_operand.vmem [shape: f32[1,128], index: 2, kind: input, shape index: {}]
  %s3 = inlined_call_operand.vmem [shape: f32[1,128], index: 3, kind: input, shape index: {}]
  %s4 = inlined_call_operand.vmem [shape: f32[1,128], index: 4, kind: input, shape index: {}]
  %s5 = inlined_call_operand.vmem [shape: bf16[128,128], index: 5, kind: output, shape index: {}]
  %s6 = sld [smem:[#allocation0]]
  $region30: #{a_call__.4} parent=0
    _
  %s8 = ssub.s32 1, %s6
  %s9 = scalar_select 0, %s8, %s6
  // Predicated region
  $region2: #{a_call__.4} parent=0 // pred_check
    _
  $region3: #{a_call__.4} parent=0 // pred_check_branch
    %11 = sbr.rel (0) target = $region5
  $region4: #{a_call__.4} parent=0 // pred_region
    _
  $region5: #{a_call__.4} parent=0 // pred_fallthru
    _
  // Predicated region
  $region6: #{a_call__.4} parent=0 // pred_check
    _
  $region7: #{a_call__.4} parent=0 // pred_check_branch
    %13 = sbr.rel (0) target = $region9
  $region8: #{a_call__.4} parent=0 // pred_region
    _
  $region9: #{a_call__.4} parent=0 // pred_fallthru
    _
  // Predicated region
  $region10: #{a_call__.4} parent=0 // pred_check
    _
  $region11: #{a_call__.4} parent=0 // pred_check_branch
    %15 = sbr.rel (0) target = $region13
  $region12: #{a_call__.4} parent=0 // pred_region
    _
  $region13: #{a_call__.4} parent=0 // pred_fallthru
    _
  // Predicated region
  $region14: #{a_call__.4} parent=0 // pred_check
    _
  $region15: #{a_call__.4} parent=0 // pred_check_branch
    %17 = sbr.rel (0) target = $region17
  $region16: #{a_call__.4} parent=0 // pred_region
    _
  $region17: #{a_call__.4} parent=0 // pred_fallthru
    _
  // Predicated region
  $region18: #{a_call__.4} parent=0 // pred_check
    _
  $region19: #{a_call__.4} parent=0 // pred_check_branch
    %19 = sbr.rel (0) target = $region21
  $region20: #{a_call__.4} parent=0 // pred_region
    _
  $region21: #{a_call__.4} parent=0 // pred_fallthru
    _
  %v20 = vld [vmem:[%s0] sm:$0xff]
  %v21 = vld [vmem:[%s0 + $0x8] sm:$0xff]
  %v22 = vld [vmem:[%s0 + $0x10] sm:$0xff]
  %v23 = vld [vmem:[%s0 + $0x18] sm:$0xff]
  %v24 = vld [vmem:[%s0 + $0x20] sm:$0xff]
  %v25 = vld [vmem:[%s0 + $0x28] sm:$0xff]
  %v26 = vld [vmem:[%s0 + $0x30] sm:$0xff]
  %v27 = vld [vmem:[%s0 + $0x38] sm:$0xff]
  %v28 = vld [vmem:[%s0 + $0x40] sm:$0xff]
  %v29 = vld [vmem:[%s0 + $0x48] sm:$0xff]
  %v30 = vld [vmem:[%s0 + $0x50] sm:$0xff]
  %v31 = vld [vmem:[%s0 + $0x58] sm:$0xff]
  %v32 = vld [vmem:[%s0 + $0x60] sm:$0xff]
  %v33 = vld [vmem:[%s0 + $0x68] sm:$0xff]
  %v34 = vld [vmem:[%s0 + $0x70] sm:$0xff]
  %v35 = vld [vmem:[%s0 + $0x78] sm:$0xff]
  %v36 = vld [vmem:[%s1] sm:$0xf]
  %v37 = vld [vmem:[%s1 + $0x4] sm:$0xf]
  %v38 = vld [vmem:[%s1 + $0x8] sm:$0xf]
  %v39 = vld [vmem:[%s1 + $0xc] sm:$0xf]
  %v40 = vld [vmem:[%s1 + $0x10] sm:$0xf]
  %v41 = vld [vmem:[%s1 + $0x14] sm:$0xf]
  %v42 = vld [vmem:[%s1 + $0x18] sm:$0xf]
  %v43 = vld [vmem:[%s1 + $0x1c] sm:$0xf]
  %v44 = vld [vmem:[%s1 + $0x20] sm:$0xf]
  %v45 = vld [vmem:[%s1 + $0x24] sm:$0xf]
  %v46 = vld [vmem:[%s1 + $0x28] sm:$0xf]
  %v47 = vld [vmem:[%s1 + $0x2c] sm:$0xf]
  %v48 = vld [vmem:[%s1 + $0x30] sm:$0xf]
  %v49 = vld [vmem:[%s1 + $0x34] sm:$0xf]
  %v50 = vld [vmem:[%s1 + $0x38] sm:$0xf]
  %v51 = vld [vmem:[%s1 + $0x3c] sm:$0xf]
  %v52 = vld [vmem:[%s1 + $0x40] sm:$0xf]
  %v53 = vld [vmem:[%s1 + $0x44] sm:$0xf]
  %v54 = vld [vmem:[%s1 + $0x48] sm:$0xf]
  %v55 = vld [vmem:[%s1 + $0x4c] sm:$0xf]
  %v56 = vld [vmem:[%s1 + $0x50] sm:$0xf]
  %v57 = vld [vmem:[%s1 + $0x54] sm:$0xf]
  %v58 = vld [vmem:[%s1 + $0x58] sm:$0xf]
  %v59 = vld [vmem:[%s1 + $0x5c] sm:$0xf]
  %v60 = vld [vmem:[%s1 + $0x60] sm:$0xf]
  %v61 = vld [vmem:[%s1 + $0x64] sm:$0xf]
  %v62 = vld [vmem:[%s1 + $0x68] sm:$0xf]
  %v63 = vld [vmem:[%s1 + $0x6c] sm:$0xf]
  %v64 = vld [vmem:[%s1 + $0x70] sm:$0xf]
  %v65 = vld [vmem:[%s1 + $0x74] sm:$0xf]
  %v66 = vld [vmem:[%s1 + $0x78] sm:$0xf]
  %v67 = vld [vmem:[%s1 + $0x7c] sm:$0xf]
  %v68 = vld [vmem:[%s2] sm:$0x1]
  %v70 = vperm.slane %v68, 0
  %v88 = vunpack.c.l.b16 %v20
  %v89 = vunpack.c.h.b16 %v20
  %v90 = vunpack.c.l.b16 %v21
  %v91 = vunpack.c.h.b16 %v21
  %v92 = vunpack.c.l.b16 %v22
  %v93 = vunpack.c.h.b16 %v22
  %v94 = vunpack.c.l.b16 %v23
  %v95 = vunpack.c.h.b16 %v23
  %v96 = vunpack.c.l.b16 %v24
  %v97 = vunpack.c.h.b16 %v24
  %v98 = vunpack.c.l.b16 %v25
  %v99 = vunpack.c.h.b16 %v25
  %v100 = vunpack.c.l.b16 %v26
  %v101 = vunpack.c.h.b16 %v26
  %v102 = vunpack.c.l.b16 %v27
  %v103 = vunpack.c.h.b16 %v27
  %v104 = vunpack.c.l.b16 %v28
  %v105 = vunpack.c.h.b16 %v28
  %v106 = vunpack.c.l.b16 %v29
  %v107 = vunpack.c.h.b16 %v29
  %v108 = vunpack.c.l.b16 %v30
  %v109 = vunpack.c.h.b16 %v30
  %v110 = vunpack.c.l.b16 %v31
  %v111 = vunpack.c.h.b16 %v31
  %v112 = vunpack.c.l.b16 %v32
  %v113 = vunpack.c.h.b16 %v32
  %v114 = vunpack.c.l.b16 %v33
  %v115 = vunpack.c.h.b16 %v33
  %v116 = vunpack.c.l.b16 %v34
  %v117 = vunpack.c.h.b16 %v34
  %v118 = vunpack.c.l.b16 %v35
  %v119 = vunpack.c.h.b16 %v35
  %v120 = vpack.c.b16 %v90, %v88
  %v121 = vpack.c.b16 %v91, %v89
  %v122 = vpack.c.b16 %v94, %v92
  %v123 = vpack.c.b16 %v95, %v93
  %v124 = vpack.c.b16 %v98, %v96
  %v125 = vpack.c.b16 %v99, %v97
  %v126 = vpack.c.b16 %v102, %v100
  %v127 = vpack.c.b16 %v103, %v101
  %v128 = vpack.c.b16 %v106, %v104
  %v129 = vpack.c.b16 %v107, %v105
  %v130 = vpack.c.b16 %v110, %v108
  %v131 = vpack.c.b16 %v111, %v109
  %v132 = vpack.c.b16 %v114, %v112
  %v133 = vpack.c.b16 %v115, %v113
  %v134 = vpack.c.b16 %v118, %v116
  %v135 = vpack.c.b16 %v119, %v117
  %v184 = vunpack.c.l.b16 %v36
  %v185 = vunpack.c.l.b16 %v37
  %v186 = vunpack.c.l.b16 %v38
  %v187 = vunpack.c.l.b16 %v39
  %v188 = vunpack.c.l.b16 %v40
  %v189 = vunpack.c.l.b16 %v41
  %v190 = vunpack.c.l.b16 %v42
  %v191 = vunpack.c.l.b16 %v43
  %v192 = vunpack.c.l.b16 %v44
  %v193 = vunpack.c.l.b16 %v45
  %v194 = vunpack.c.l.b16 %v46
  %v195 = vunpack.c.l.b16 %v47
  %v196 = vunpack.c.l.b16 %v48
  %v197 = vunpack.c.l.b16 %v49
  %v198 = vunpack.c.l.b16 %v50
  %v199 = vunpack.c.l.b16 %v51
  %v200 = vunpack.c.l.b16 %v52
  %v201 = vunpack.c.l.b16 %v53
  %v202 = vunpack.c.l.b16 %v54
  %v203 = vunpack.c.l.b16 %v55
  %v204 = vunpack.c.l.b16 %v56
  %v205 = vunpack.c.l.b16 %v57
  %v206 = vunpack.c.l.b16 %v58
  %v207 = vunpack.c.l.b16 %v59
  %v208 = vunpack.c.l.b16 %v60
  %v209 = vunpack.c.l.b16 %v61
  %v210 = vunpack.c.l.b16 %v62
  %v211 = vunpack.c.l.b16 %v63
  %v212 = vunpack.c.l.b16 %v64
  %v213 = vunpack.c.l.b16 %v65
  %v214 = vunpack.c.l.b16 %v66
  %v215 = vunpack.c.l.b16 %v67
  %v216 = vpack.c.b16 %v185, %v184
  %v217 = vpack.c.b16 %v187, %v186
  %v218 = vpack.c.b16 %v189, %v188
  %v219 = vpack.c.b16 %v191, %v190
  %v220 = vpack.c.b16 %v193, %v192
  %v221 = vpack.c.b16 %v195, %v194
  %v222 = vpack.c.b16 %v197, %v196
  %v223 = vpack.c.b16 %v199, %v198
  %v224 = vpack.c.b16 %v201, %v200
  %v225 = vpack.c.b16 %v203, %v202
  %v226 = vpack.c.b16 %v205, %v204
  %v227 = vpack.c.b16 %v207, %v206
  %v228 = vpack.c.b16 %v209, %v208
  %v229 = vpack.c.b16 %v211, %v210
  %v230 = vpack.c.b16 %v213, %v212
  %v231 = vpack.c.b16 %v215, %v214
  %248 = vmatpush.bf16.msra.mxu0 %v223
  %249 = vmatpush.bf16.msra.mxu0 %v222
  %250 = vmatpush.bf16.msra.mxu0 %v221
  %251 = vmatpush.bf16.msra.mxu0 %v220
  %252 = vmatpush.bf16.msra.mxu0 %v219
  %253 = vmatpush.bf16.msra.mxu0 %v218
  %254 = vmatpush.bf16.msra.mxu0 %v217
  %255 = vmatpush.bf16.msra.mxu0 %v216
  %256 = vmatmul.bf16.gmra.mxu0 %v120
  %v257 = vpop.f32.mrf.mxu0
  %v258 = vadd.f32 %v70, %v257
  %v259 = vpop.f32.mrf.mxu0
  %v260 = vadd.f32 %v70, %v259
  %261 = vmatmul.bf16.gmra.mxu0 %v122
  %v262 = vpop.f32.mrf.mxu0
  %v263 = vadd.f32 %v70, %v262
  %v264 = vpop.f32.mrf.mxu0
  %v265 = vadd.f32 %v70, %v264
  %266 = vmatmul.bf16.gmra.mxu0 %v124
  %v267 = vpop.f32.mrf.mxu0
  %v268 = vadd.f32 %v70, %v267
  %v269 = vpop.f32.mrf.mxu0
  %v270 = vadd.f32 %v70, %v269
  %271 = vmatmul.bf16.gmra.mxu0 %v126
  %v272 = vpop.f32.mrf.mxu0
  %v273 = vadd.f32 %v70, %v272
  %v274 = vpop.f32.mrf.mxu0
  %v275 = vadd.f32 %v70, %v274
  %276 = vmatmul.bf16.gmra.mxu0 %v128
  %v277 = vpop.f32.mrf.mxu0
  %v278 = vadd.f32 %v70, %v277
  %v279 = vpop.f32.mrf.mxu0
  %v280 = vadd.f32 %v70, %v279
  %281 = vmatmul.bf16.gmra.mxu0 %v130
  %v282 = vpop.f32.mrf.mxu0
  %v283 = vadd.f32 %v70, %v282
  %v284 = vpop.f32.mrf.mxu0
  %v285 = vadd.f32 %v70, %v284
  %286 = vmatmul.bf16.gmra.mxu0 %v132
  %v287 = vpop.f32.mrf.mxu0
  %v288 = vadd.f32 %v70, %v287
  %v289 = vpop.f32.mrf.mxu0
  %v290 = vadd.f32 %v70, %v289
  %291 = vmatmul.bf16.gmra.mxu0 %v134
  %v292 = vpop.f32.mrf.mxu0
  %v293 = vadd.f32 %v70, %v292
  %v294 = vpop.f32.mrf.mxu0
  %v295 = vadd.f32 %v70, %v294
  %296 = vdwg.mxu0
  %297 = vmatpush.bf16.msra.mxu0 %v231
  %298 = vmatpush.bf16.msra.mxu0 %v230
  %299 = vmatpush.bf16.msra.mxu0 %v229
  %300 = vmatpush.bf16.msra.mxu0 %v228
  %301 = vmatpush.bf16.msra.mxu0 %v227
  %302 = vmatpush.bf16.msra.mxu0 %v226
  %303 = vmatpush.bf16.msra.mxu0 %v225
  %304 = vmatpush.bf16.msra.mxu0 %v224
  %305 = vmatmul.bf16.gmra.mxu0 %v121
  %v306 = vpop.f32.mrf.mxu0
  %v307 = vadd.f32 %v258, %v306
  %v308 = vpop.f32.mrf.mxu0
  %v309 = vadd.f32 %v260, %v308
  %310 = vmatmul.bf16.gmra.mxu0 %v123
  %v311 = vpop.f32.mrf.mxu0
  %v312 = vadd.f32 %v263, %v311
  %v313 = vpop.f32.mrf.mxu0
  %v314 = vadd.f32 %v265, %v313
  %315 = vmatmul.bf16.gmra.mxu0 %v125
  %v316 = vpop.f32.mrf.mxu0
  %v317 = vadd.f32 %v268, %v316
  %v318 = vpop.f32.mrf.mxu0
  %v319 = vadd.f32 %v270, %v318
  %320 = vmatmul.bf16.gmra.mxu0 %v127
  %v321 = vpop.f32.mrf.mxu0
  %v322 = vadd.f32 %v273, %v321
  %v323 = vpop.f32.mrf.mxu0
  %v324 = vadd.f32 %v275, %v323
  %325 = vmatmul.bf16.gmra.mxu0 %v129
  %v326 = vpop.f32.mrf.mxu0
  %v327 = vadd.f32 %v278, %v326
  %v328 = vpop.f32.mrf.mxu0
  %v329 = vadd.f32 %v280, %v328
  %330 = vmatmul.bf16.gmra.mxu0 %v131
  %v331 = vpop.f32.mrf.mxu0
  %v332 = vadd.f32 %v283, %v331
  %v333 = vpop.f32.mrf.mxu0
  %v334 = vadd.f32 %v285, %v333
  %335 = vmatmul.bf16.gmra.mxu0 %v133
  %v336 = vpop.f32.mrf.mxu0
  %v337 = vadd.f32 %v288, %v336
  %v338 = vpop.f32.mrf.mxu0
  %v339 = vadd.f32 %v290, %v338
  %340 = vmatmul.bf16.gmra.mxu0 %v135
  %v341 = vpop.f32.mrf.mxu0
  %v342 = vadd.f32 %v293, %v341
  %v343 = vpop.f32.mrf.mxu0
  %v344 = vadd.f32 %v295, %v343
  %345 = vdwg.mxu0
  %v346 = vadd.f32 %v307, %v309
  %v347 = vadd.f32 %v346, %v312
  %v348 = vadd.f32 %v347, %v314
  %v349 = vadd.f32 %v348, %v317
  %v350 = vadd.f32 %v349, %v319
  %v351 = vadd.f32 %v350, %v322
  %v352 = vadd.f32 %v351, %v324
  %v353 = vadd.f32 %v352, %v327
  %v354 = vadd.f32 %v353, %v329
  %v355 = vadd.f32 %v354, %v332
  %v356 = vadd.f32 %v355, %v334
  %v357 = vadd.f32 %v356, %v337
  %v358 = vadd.f32 %v357, %v339
  %v359 = vadd.f32 %v358, %v342
  %v360 = vadd.f32 %v359, %v344
  %v361 = vrot.slane %v360, 4
  %v362 = vadd.f32 %v360, %v361
  %v363 = vrot.slane %v362, 2
  %v364 = vadd.f32 %v362, %v363
  %v365 = vrot.slane %v364, 1
  %v366 = vadd.f32 %v364, %v365
  %v367 = vmul.f32 %v366, 0.0078125
  %v368 = vmul.f32 %v307, %v307
  %v369 = vmul.f32 %v309, %v309
  %v370 = vmul.f32 %v312, %v312
  %v371 = vmul.f32 %v314, %v314
  %v372 = vmul.f32 %v317, %v317
  %v373 = vmul.f32 %v319, %v319
  %v374 = vmul.f32 %v322, %v322
  %v375 = vmul.f32 %v324, %v324
  %v376 = vmul.f32 %v327, %v327
  %v377 = vmul.f32 %v329, %v329
  %v378 = vmul.f32 %v332, %v332
  %v379 = vmul.f32 %v334, %v334
  %v380 = vmul.f32 %v337, %v337
  %v381 = vmul.f32 %v339, %v339
  %v382 = vmul.f32 %v342, %v342
  %v383 = vmul.f32 %v344, %v344
  %v384 = vadd.f32 %v368, %v369
  %v385 = vadd.f32 %v384, %v370
  %v386 = vadd.f32 %v385, %v371
  %v387 = vadd.f32 %v386, %v372
  %v388 = vadd.f32 %v387, %v373
  %v389 = vadd.f32 %v388, %v374
  %v390 = vadd.f32 %v389, %v375
  %v391 = vadd.f32 %v390, %v376
  %v392 = vadd.f32 %v391, %v377
  %v393 = vadd.f32 %v392, %v378
  %v394 = vadd.f32 %v393, %v379
  %v395 = vadd.f32 %v394, %v380
  %v396 = vadd.f32 %v395, %v381
  %v397 = vadd.f32 %v396, %v382
  %v398 = vadd.f32 %v397, %v383
  %v399 = vrot.slane %v398, 4
  %v400 = vadd.f32 %v398, %v399
  %v401 = vrot.slane %v400, 2
  %v402 = vadd.f32 %v400, %v401
  %v403 = vrot.slane %v402, 1
  %v404 = vadd.f32 %v402, %v403
  %v405 = vmul.f32 %v404, 0.0078125
  %v406 = vmul.f32 %v367, %v367
  %v407 = vsub.f32 %v405, %v406
  %v408 = vmax.f32 %v407, 0.0
  %v409 = vld [vmem:[%s3] sm:$0x1]
  %v410 = vadd.f32 %v408, 1e-05
  %v411 = vrsqrt.pop %v410
  %v412 = vmul.f32 %v411, %v410
  %v413 = vmul.f32 %v412, %v411
  %v414 = vmul.f32 0.5, %v413
  %v415 = vsub.f32 1.5, %v414
  %v416 = vmul.f32 %v411, %v415
  %vm417 = vweird.f32 %v410
  %vm418 = vweird.f32 %v411
  %vm419 = vmor %vm417, %vm418
  %v420 = vsel %vm419, %v411, %v416
  %v421 = vmul.f32 %v409, %v420
  %v422 = vld [vmem:[%s4] sm:$0x1]
  %v423 = vmul.f32 %v367, %v421
  %v424 = vsub.f32 %v422, %v423
  %v426 = vperm.slane %v421, 0
  %v428 = vmul.f32 %v307, %v426
  %v429 = vmul.f32 %v309, %v426
  %v430 = vmul.f32 %v312, %v426
  %v431 = vmul.f32 %v314, %v426
  %v432 = vmul.f32 %v317, %v426
  %v433 = vmul.f32 %v319, %v426
  %v434 = vmul.f32 %v322, %v426
  %v435 = vmul.f32 %v324, %v426
  %v436 = vmul.f32 %v327, %v426
  %v437 = vmul.f32 %v329, %v426
  %v438 = vmul.f32 %v332, %v426
  %v439 = vmul.f32 %v334, %v426
  %v440 = vmul.f32 %v337, %v426
  %v441 = vmul.f32 %v339, %v426
  %v442 = vmul.f32 %v342, %v426
  %v443 = vmul.f32 %v344, %v426
  %v445 = vperm.slane %v424, 0
  %v447 = vadd.f32 %v428, %v445
  %v448 = vadd.f32 %v429, %v445
  %v449 = vadd.f32 %v430, %v445
  %v450 = vadd.f32 %v431, %v445
  %v451 = vadd.f32 %v432, %v445
  %v452 = vadd.f32 %v433, %v445
  %v453 = vadd.f32 %v434, %v445
  %v454 = vadd.f32 %v435, %v445
  %v455 = vadd.f32 %v436, %v445
  %v456 = vadd.f32 %v437, %v445
  %v457 = vadd.f32 %v438, %v445
  %v458 = vadd.f32 %v439, %v445
  %v459 = vadd.f32 %v440, %v445
  %v460 = vadd.f32 %v441, %v445
  %v461 = vadd.f32 %v442, %v445
  %v462 = vadd.f32 %v443, %v445
  %vm463 = vcmp.gt.f32.partialorder %v447, 0.0
  %vm464 = vcmp.gt.f32.partialorder %v448, 0.0
  %vm465 = vcmp.gt.f32.partialorder %v449, 0.0
  %vm466 = vcmp.gt.f32.partialorder %v450, 0.0
  %vm467 = vcmp.gt.f32.partialorder %v451, 0.0
  %vm468 = vcmp.gt.f32.partialorder %v452, 0.0
  %vm469 = vcmp.gt.f32.partialorder %v453, 0.0
  %vm470 = vcmp.gt.f32.partialorder %v454, 0.0
  %vm471 = vcmp.gt.f32.partialorder %v455, 0.0
  %vm472 = vcmp.gt.f32.partialorder %v456, 0.0
  %vm473 = vcmp.gt.f32.partialorder %v457, 0.0
  %vm474 = vcmp.gt.f32.partialorder %v458, 0.0
  %vm475 = vcmp.gt.f32.partialorder %v459, 0.0
  %vm476 = vcmp.gt.f32.partialorder %v460, 0.0
  %vm477 = vcmp.gt.f32.partialorder %v461, 0.0
  %vm478 = vcmp.gt.f32.partialorder %v462, 0.0
  %v479 = vmul.f32 %v447, 0.2
  %v480 = vmul.f32 %v448, 0.2
  %v481 = vmul.f32 %v449, 0.2
  %v482 = vmul.f32 %v450, 0.2
  %v483 = vmul.f32 %v451, 0.2
  %v484 = vmul.f32 %v452, 0.2
  %v485 = vmul.f32 %v453, 0.2
  %v486 = vmul.f32 %v454, 0.2
  %v487 = vmul.f32 %v455, 0.2
  %v488 = vmul.f32 %v456, 0.2
  %v489 = vmul.f32 %v457, 0.2
  %v490 = vmul.f32 %v458, 0.2
  %v491 = vmul.f32 %v459, 0.2
  %v492 = vmul.f32 %v460, 0.2
  %v493 = vmul.f32 %v461, 0.2
  %v494 = vmul.f32 %v462, 0.2
  %v495 = vsel %vm463, %v447, %v479
  %v496 = vsel %vm464, %v448, %v480
  %v497 = vsel %vm465, %v449, %v481
  %v498 = vsel %vm466, %v450, %v482
  %v499 = vsel %vm467, %v451, %v483
  %v500 = vsel %vm468, %v452, %v484
  %v501 = vsel %vm469, %v453, %v485
  %v502 = vsel %vm470, %v454, %v486
  %v503 = vsel %vm471, %v455, %v487
  %v504 = vsel %vm472, %v456, %v488
  %v505 = vsel %vm473, %v457, %v489
  %v506 = vsel %vm474, %v458, %v490
  %v507 = vsel %vm475, %v459, %v491
  %v508 = vsel %vm476, %v460, %v492
  %v509 = vsel %vm477, %v461, %v493
  %v510 = vsel %vm478, %v462, %v494
  %v511 = vpack.c.bf16 %v495, %v495
  %v512 = vpack.c.bf16 %v496, %v496
  %v513 = vpack.c.bf16 %v497, %v497
  %v514 = vpack.c.bf16 %v498, %v498
  %v515 = vpack.c.bf16 %v499, %v499
  %v516 = vpack.c.bf16 %v500, %v500
  %v517 = vpack.c.bf16 %v501, %v501
  %v518 = vpack.c.bf16 %v502, %v502
  %v519 = vpack.c.bf16 %v503, %v503
  %v520 = vpack.c.bf16 %v504, %v504
  %v521 = vpack.c.bf16 %v505, %v505
  %v522 = vpack.c.bf16 %v506, %v506
  %v523 = vpack.c.bf16 %v507, %v507
  %v524 = vpack.c.bf16 %v508, %v508
  %v525 = vpack.c.bf16 %v509, %v509
  %v526 = vpack.c.bf16 %v510, %v510
  %527 = vst [vmem:[%s5] sm:$0xf] %v511
  %528 = vst [vmem:[%s5 + $0x4] sm:$0xf] %v512
  %529 = vst [vmem:[%s5 + $0x8] sm:$0xf] %v513
  %530 = vst [vmem:[%s5 + $0xc] sm:$0xf] %v514
  %531 = vst [vmem:[%s5 + $0x10] sm:$0xf] %v515
  %532 = vst [vmem:[%s5 + $0x14] sm:$0xf] %v516
  %533 = vst [vmem:[%s5 + $0x18] sm:$0xf] %v517
  %534 = vst [vmem:[%s5 + $0x1c] sm:$0xf] %v518
  %535 = vst [vmem:[%s5 + $0x20] sm:$0xf] %v519
  %536 = vst [vmem:[%s5 + $0x24] sm:$0xf] %v520
  %537 = vst [vmem:[%s5 + $0x28] sm:$0xf] %v521
  %538 = vst [vmem:[%s5 + $0x2c] sm:$0xf] %v522
  %539 = vst [vmem:[%s5 + $0x30] sm:$0xf] %v523
  %540 = vst [vmem:[%s5 + $0x34] sm:$0xf] %v524
  %541 = vst [vmem:[%s5 + $0x38] sm:$0xf] %v525
  %542 = vst [vmem:[%s5 + $0x3c] sm:$0xf] %v526
  // Predicated region
  $region22: #{a_call__.4} parent=0 // pred_check
    _
  $region23: #{a_call__.4} parent=0 // pred_check_branch
    %544 = sbr.rel (0) target = $region25
  $region24: #{a_call__.4} parent=0 // pred_region
    _
  $region25: #{a_call__.4} parent=0 // pred_fallthru
    _
  // Predicated region
  $region26: #{a_call__.4} parent=0 // pred_check
    _
  $region27: #{a_call__.4} parent=0 // pred_check_branch
    %546 = sbr.rel (0) target = $region29
  $region28: #{a_call__.4} parent=0 // pred_region
    _
  $region29: #{a_call__.4} parent=0 // pred_fallthru
    _

// kernel: a_call__.5
$region0: #{a_call__.5}
  #allocation0 [shape = 'u32[]', space=smem, size = 0x4, offset = 0x4, fixed_abs, tag = 'smem constant byte address 0x4 - core index']
  #allocation1 [shape = 'u32[72,128]{1,0:T(1,128)}', space=vmem, size = 0x9000, scoped, tag = 'internal scratch']
  %s0 = inlined_call_operand.vmem [shape: bf16[32,512], index: 0, kind: input, shape index: {}]
  %s1 = inlined_call_operand.vmem [shape: bf16[512,128], index: 1, kind: input, shape index: {}]
  %s2 = inlined_call_operand.vmem [shape: f32[1,128], index: 2, kind: input, shape index: {}]
  %s3 = inlined_call_operand.vmem [shape: f32[1,128], index: 3, kind: input, shape index: {}]
  %s4 = inlined_call_operand.vmem [shape: f32[1,128], index: 4, kind: input, shape index: {}]
  %s5 = inlined_call_operand.vmem [shape: bf16[2048,128], index: 5, kind: input, shape index: {}]
  %s6 = inlined_call_operand.vmem [shape: f32[1,128], index: 6, kind: input, shape index: {}]
  %s7 = inlined_call_operand.hbm [shape: f32[2,128], index: 7, kind: output, shape index: {}]
  %s8 = sld [smem:[#allocation0]]
  $region38: #{a_call__.5} parent=0
    _
  %s10 = ssub.s32 1, %s8
  %s11 = scalar_select 0, %s10, %s8
  $region1: #{a_call__.5} parent=0
    #allocation2 [shape = 'u8[1024]{0}', space=vmem, size = 0x400, scoped, tag = 'output window, operand 0, single buffered']
    #allocation3 [shape = 's32[1]{0}', space=sflag, size = 0x4, scoped, tag = 'scoped memory for a_call__.5']
    %12 = vsyncpa [#allocation3], 0
    // Predicated region
    $region2: #{a_call__.5} parent=1 // pred_check
      _
    $region3: #{a_call__.5} parent=1 // pred_check_branch
      %14 = sbr.rel (0) target = $region5
    $region4: #{a_call__.5} parent=1 // pred_region
      _
    $region5: #{a_call__.5} parent=1 // pred_fallthru
      _
    // Predicated region
    $region6: #{a_call__.5} parent=1 // pred_check
      _
    $region7: #{a_call__.5} parent=1 // pred_check_branch
      %16 = sbr.rel (0) target = $region9
    $region8: #{a_call__.5} parent=1 // pred_region
      _
    $region9: #{a_call__.5} parent=1 // pred_fallthru
      _
    // Predicated region
    $region10: #{a_call__.5} parent=1 // pred_check
      _
    $region11: #{a_call__.5} parent=1 // pred_check_branch
      %18 = sbr.rel (0) target = $region13
    $region12: #{a_call__.5} parent=1 // pred_region
      _
    $region13: #{a_call__.5} parent=1 // pred_fallthru
      _
    // Predicated region
    $region14: #{a_call__.5} parent=1 // pred_check
      _
    $region15: #{a_call__.5} parent=1 // pred_check_branch
      %20 = sbr.rel (0) target = $region17
    $region16: #{a_call__.5} parent=1 // pred_region
      _
    $region17: #{a_call__.5} parent=1 // pred_fallthru
      _
    // Predicated region
    $region18: #{a_call__.5} parent=1 // pred_check
      _
    $region19: #{a_call__.5} parent=1 // pred_check_branch
      %22 = sbr.rel (0) target = $region21
    $region20: #{a_call__.5} parent=1 // pred_region
      _
    $region21: #{a_call__.5} parent=1 // pred_fallthru
      _
    // Predicated region
    $region22: #{a_call__.5} parent=1 // pred_check
      _
    $region23: #{a_call__.5} parent=1 // pred_check_branch
      %24 = sbr.rel (0) target = $region25
    $region24: #{a_call__.5} parent=1 // pred_region
      _
    $region25: #{a_call__.5} parent=1 // pred_fallthru
      _
    // Predicated region
    $region26: #{a_call__.5} parent=1 // pred_check
      _
    $region27: #{a_call__.5} parent=1 // pred_check_branch
      %26 = sbr.rel (0) target = $region29
    $region28: #{a_call__.5} parent=1 // pred_region
      _
    $region29: #{a_call__.5} parent=1 // pred_fallthru
      _
    %v27 = vld [vmem:[%s0] sm:$0xff]
    %v28 = vld [vmem:[%s0 + $0x8] sm:$0xff]
    %v29 = vld [vmem:[%s0 + $0x10] sm:$0xff]
    %v30 = vld [vmem:[%s0 + $0x18] sm:$0xff]
    %v31 = vld [vmem:[%s0 + $0x20] sm:$0xff]
    %v32 = vld [vmem:[%s0 + $0x28] sm:$0xff]
    %v33 = vld [vmem:[%s0 + $0x30] sm:$0xff]
    %v34 = vld [vmem:[%s0 + $0x38] sm:$0xff]
    %v35 = vld [vmem:[%s1] sm:$0xf]
    %v36 = vld [vmem:[%s1 + $0x4] sm:$0xf]
    %v37 = vld [vmem:[%s1 + $0x8] sm:$0xf]
    %v38 = vld [vmem:[%s1 + $0xc] sm:$0xf]
    %v39 = vld [vmem:[%s1 + $0x10] sm:$0xf]
    %v40 = vld [vmem:[%s1 + $0x14] sm:$0xf]
    %v41 = vld [vmem:[%s1 + $0x18] sm:$0xf]
    %v42 = vld [vmem:[%s1 + $0x1c] sm:$0xf]
    %v43 = vld [vmem:[%s1 + $0x20] sm:$0xf]
    %v44 = vld [vmem:[%s1 + $0x24] sm:$0xf]
    %v45 = vld [vmem:[%s1 + $0x28] sm:$0xf]
    %v46 = vld [vmem:[%s1 + $0x2c] sm:$0xf]
    %v47 = vld [vmem:[%s1 + $0x30] sm:$0xf]
    %v48 = vld [vmem:[%s1 + $0x34] sm:$0xf]
    %v49 = vld [vmem:[%s1 + $0x38] sm:$0xf]
    %v50 = vld [vmem:[%s1 + $0x3c] sm:$0xf]
    %v51 = vld [vmem:[%s1 + $0x40] sm:$0xf]
    %v52 = vld [vmem:[%s1 + $0x44] sm:$0xf]
    %v53 = vld [vmem:[%s1 + $0x48] sm:$0xf]
    %v54 = vld [vmem:[%s1 + $0x4c] sm:$0xf]
    %v55 = vld [vmem:[%s1 + $0x50] sm:$0xf]
    %v56 = vld [vmem:[%s1 + $0x54] sm:$0xf]
    %v57 = vld [vmem:[%s1 + $0x58] sm:$0xf]
    %v58 = vld [vmem:[%s1 + $0x5c] sm:$0xf]
    %v59 = vld [vmem:[%s1 + $0x60] sm:$0xf]
    %v60 = vld [vmem:[%s1 + $0x64] sm:$0xf]
    %v61 = vld [vmem:[%s1 + $0x68] sm:$0xf]
    %v62 = vld [vmem:[%s1 + $0x6c] sm:$0xf]
    %v63 = vld [vmem:[%s1 + $0x70] sm:$0xf]
    %v64 = vld [vmem:[%s1 + $0x74] sm:$0xf]
    %v65 = vld [vmem:[%s1 + $0x78] sm:$0xf]
    %v66 = vld [vmem:[%s1 + $0x7c] sm:$0xf]
    %v67 = vld [vmem:[%s1 + $0x80] sm:$0xf]
    %v68 = vld [vmem:[%s1 + $0x84] sm:$0xf]
    %v69 = vld [vmem:[%s1 + $0x88] sm:$0xf]
    %v70 = vld [vmem:[%s1 + $0x8c] sm:$0xf]
    %v71 = vld [vmem:[%s1 + $0x90] sm:$0xf]
    %v72 = vld [vmem:[%s1 + $0x94] sm:$0xf]
    %v73 = vld [vmem:[%s1 + $0x98] sm:$0xf]
    %v74 = vld [vmem:[%s1 + $0x9c] sm:$0xf]
    %v75 = vld [vmem:[%s1 + $0xa0] sm:$0xf]
    %v76 = vld [vmem:[%s1 + $0xa4] sm:$0xf]
    %v77 = vld [vmem:[%s1 + $0xa8] sm:$0xf]
    %v78 = vld [vmem:[%s1 + $0xac] sm:$0xf]
    %v79 = vld [vmem:[%s1 + $0xb0] sm:$0xf]
    %v80 = vld [vmem:[%s1 + $0xb4] sm:$0xf]
    %v81 = vld [vmem:[%s1 + $0xb8] sm:$0xf]
    %v82 = vld [vmem:[%s1 + $0xbc] sm:$0xf]
    %v83 = vld [vmem:[%s1 + $0xc0] sm:$0xf]
    %v84 = vld [vmem:[%s1 + $0xc4] sm:$0xf]
    %v85 = vld [vmem:[%s1 + $0xc8] sm:$0xf]
    %v86 = vld [vmem:[%s1 + $0xcc] sm:$0xf]
    %v87 = vld [vmem:[%s1 + $0xd0] sm:$0xf]
    %v88 = vld [vmem:[%s1 + $0xd4] sm:$0xf]
    %v89 = vld [vmem:[%s1 + $0xd8] sm:$0xf]
    %v90 = vld [vmem:[%s1 + $0xdc] sm:$0xf]
    %v91 = vld [vmem:[%s1 + $0xe0] sm:$0xf]
    %v92 = vld [vmem:[%s1 + $0xe4] sm:$0xf]
    %v93 = vld [vmem:[%s1 + $0xe8] sm:$0xf]
    %v94 = vld [vmem:[%s1 + $0xec] sm:$0xf]
    %v95 = vld [vmem:[%s1 + $0xf0] sm:$0xf]
    %v96 = vld [vmem:[%s1 + $0xf4] sm:$0xf]
    %v97 = vld [vmem:[%s1 + $0xf8] sm:$0xf]
    %v98 = vld [vmem:[%s1 + $0xfc] sm:$0xf]
    %v99 = vld [vmem:[%s2] sm:$0x1]
    %v101 = vperm.slane %v99, 0
    %v111 = vunpack.c.l.b16 %v27
    %v112 = vunpack.c.h.b16 %v27
    %v113 = vunpack.c.l.b16 %v28
    %v114 = vunpack.c.h.b16 %v28
    %v115 = vunpack.c.l.b16 %v29
    %v116 = vunpack.c.h.b16 %v29
    %v117 = vunpack.c.l.b16 %v30
    %v118 = vunpack.c.h.b16 %v30
    %v119 = vunpack.c.l.b16 %v31
    %v120 = vunpack.c.h.b16 %v31
    %v121 = vunpack.c.l.b16 %v32
    %v122 = vunpack.c.h.b16 %v32
    %v123 = vunpack.c.l.b16 %v33
    %v124 = vunpack.c.h.b16 %v33
    %v125 = vunpack.c.l.b16 %v34
    %v126 = vunpack.c.h.b16 %v34
    %v127 = vpack.c.b16 %v115, %v111
    %v128 = vpack.c.b16 %v116, %v112
    %v129 = vpack.c.b16 %v117, %v113
    %v130 = vpack.c.b16 %v118, %v114
    %v131 = vpack.c.b16 %v123, %v119
    %v132 = vpack.c.b16 %v124, %v120
    %v133 = vpack.c.b16 %v125, %v121
    %v134 = vpack.c.b16 %v126, %v122
    %v207 = vunpack.c.l.b16 %v35
    %v208 = vunpack.c.l.b16 %v36
    %v209 = vunpack.c.l.b16 %v37
    %v210 = vunpack.c.l.b16 %v38
    %v211 = vunpack.c.l.b16 %v39
    %v212 = vunpack.c.l.b16 %v40
    %v213 = vunpack.c.l.b16 %v41
    %v214 = vunpack.c.l.b16 %v42
    %v215 = vunpack.c.l.b16 %v43
    %v216 = vunpack.c.l.b16 %v44
    %v217 = vunpack.c.l.b16 %v45
    %v218 = vunpack.c.l.b16 %v46
    %v219 = vunpack.c.l.b16 %v47
    %v220 = vunpack.c.l.b16 %v48
    %v221 = vunpack.c.l.b16 %v49
    %v222 = vunpack.c.l.b16 %v50
    %v223 = vunpack.c.l.b16 %v51
    %v224 = vunpack.c.l.b16 %v52
    %v225 = vunpack.c.l.b16 %v53
    %v226 = vunpack.c.l.b16 %v54
    %v227 = vunpack.c.l.b16 %v55
    %v228 = vunpack.c.l.b16 %v56
    %v229 = vunpack.c.l.b16 %v57
    %v230 = vunpack.c.l.b16 %v58
    %v231 = vunpack.c.l.b16 %v59
    %v232 = vunpack.c.l.b16 %v60
    %v233 = vunpack.c.l.b16 %v61
    %v234 = vunpack.c.l.b16 %v62
    %v235 = vunpack.c.l.b16 %v63
    %v236 = vunpack.c.l.b16 %v64
    %v237 = vunpack.c.l.b16 %v65
    %v238 = vunpack.c.l.b16 %v66
    %v239 = vunpack.c.l.b16 %v67
    %v240 = vunpack.c.l.b16 %v68
    %v241 = vunpack.c.l.b16 %v69
    %v242 = vunpack.c.l.b16 %v70
    %v243 = vunpack.c.l.b16 %v71
    %v244 = vunpack.c.l.b16 %v72
    %v245 = vunpack.c.l.b16 %v73
    %v246 = vunpack.c.l.b16 %v74
    %v247 = vunpack.c.l.b16 %v75
    %v248 = vunpack.c.l.b16 %v76
    %v249 = vunpack.c.l.b16 %v77
    %v250 = vunpack.c.l.b16 %v78
    %v251 = vunpack.c.l.b16 %v79
    %v252 = vunpack.c.l.b16 %v80
    %v253 = vunpack.c.l.b16 %v81
    %v254 = vunpack.c.l.b16 %v82
    %v255 = vunpack.c.l.b16 %v83
    %v256 = vunpack.c.l.b16 %v84
    %v257 = vunpack.c.l.b16 %v85
    %v258 = vunpack.c.l.b16 %v86
    %v259 = vunpack.c.l.b16 %v87
    %v260 = vunpack.c.l.b16 %v88
    %v261 = vunpack.c.l.b16 %v89
    %v262 = vunpack.c.l.b16 %v90
    %v263 = vunpack.c.l.b16 %v91
    %v264 = vunpack.c.l.b16 %v92
    %v265 = vunpack.c.l.b16 %v93
    %v266 = vunpack.c.l.b16 %v94
    %v267 = vunpack.c.l.b16 %v95
    %v268 = vunpack.c.l.b16 %v96
    %v269 = vunpack.c.l.b16 %v97
    %v270 = vunpack.c.l.b16 %v98
    %v271 = vpack.c.b16 %v208, %v207
    %v272 = vpack.c.b16 %v210, %v209
    %v273 = vpack.c.b16 %v212, %v211
    %v274 = vpack.c.b16 %v214, %v213
    %v275 = vpack.c.b16 %v216, %v215
    %v276 = vpack.c.b16 %v218, %v217
    %v277 = vpack.c.b16 %v220, %v219
    %v278 = vpack.c.b16 %v222, %v221
    %v279 = vpack.c.b16 %v224, %v223
    %v280 = vpack.c.b16 %v226, %v225
    %v281 = vpack.c.b16 %v228, %v227
    %v282 = vpack.c.b16 %v230, %v229
    %v283 = vpack.c.b16 %v232, %v231
    %v284 = vpack.c.b16 %v234, %v233
    %v285 = vpack.c.b16 %v236, %v235
    %v286 = vpack.c.b16 %v238, %v237
    %v287 = vpack.c.b16 %v240, %v239
    %v288 = vpack.c.b16 %v242, %v241
    %v289 = vpack.c.b16 %v244, %v243
    %v290 = vpack.c.b16 %v246, %v245
    %v291 = vpack.c.b16 %v248, %v247
    %v292 = vpack.c.b16 %v250, %v249
    %v293 = vpack.c.b16 %v252, %v251
    %v294 = vpack.c.b16 %v254, %v253
    %v295 = vpack.c.b16 %v256, %v255
    %v296 = vpack.c.b16 %v258, %v257
    %v297 = vpack.c.b16 %v260, %v259
    %v298 = vpack.c.b16 %v262, %v261
    %v299 = vpack.c.b16 %v264, %v263
    %v300 = vpack.c.b16 %v266, %v265
    %v301 = vpack.c.b16 %v268, %v267
    %v302 = vpack.c.b16 %v270, %v269
    %335 = vmatpush.bf16.msra.mxu0 %v278
    %336 = vmatpush.bf16.msra.mxu0 %v277
    %337 = vmatpush.bf16.msra.mxu0 %v276
    %338 = vmatpush.bf16.msra.mxu0 %v275
    %339 = vmatpush.bf16.msra.mxu0 %v274
    %340 = vmatpush.bf16.msra.mxu0 %v273
    %341 = vmatpush.bf16.msra.mxu0 %v272
    %342 = vmatpush.bf16.msra.mxu0 %v271
    %343 = vmatmul.bf16.gmra.mxu0 %v127
    %v344 = vpop.f32.mrf.mxu0
    %v345 = vadd.f32 %v101, %v344
    %v346 = vpop.f32.mrf.mxu0
    %v347 = vadd.f32 %v101, %v346
    %348 = vmatmul.bf16.gmra.mxu0 %v131
    %v349 = vpop.f32.mrf.mxu0
    %v350 = vadd.f32 %v101, %v349
    %v351 = vpop.f32.mrf.mxu0
    %v352 = vadd.f32 %v101, %v351
    %353 = vdwg.mxu0
    %354 = vmatpush.bf16.msra.mxu0 %v286
    %355 = vmatpush.bf16.msra.mxu0 %v285
    %356 = vmatpush.bf16.msra.mxu0 %v284
    %357 = vmatpush.bf16.msra.mxu0 %v283
    %358 = vmatpush.bf16.msra.mxu0 %v282
    %359 = vmatpush.bf16.msra.mxu0 %v281
    %360 = vmatpush.bf16.msra.mxu0 %v280
    %361 = vmatpush.bf16.msra.mxu0 %v279
    %362 = vmatmul.bf16.gmra.mxu0 %v128
    %v363 = vpop.f32.mrf.mxu0
    %v364 = vadd.f32 %v345, %v363
    %v365 = vpop.f32.mrf.mxu0
    %v366 = vadd.f32 %v347, %v365
    %367 = vmatmul.bf16.gmra.mxu0 %v132
    %v368 = vpop.f32.mrf.mxu0
    %v369 = vadd.f32 %v350, %v368
    %v370 = vpop.f32.mrf.mxu0
    %v371 = vadd.f32 %v352, %v370
    %372 = vdwg.mxu0
    %373 = vmatpush.bf16.msra.mxu0 %v294
    %374 = vmatpush.bf16.msra.mxu0 %v293
    %375 = vmatpush.bf16.msra.mxu0 %v292
    %376 = vmatpush.bf16.msra.mxu0 %v291
    %377 = vmatpush.bf16.msra.mxu0 %v290
    %378 = vmatpush.bf16.msra.mxu0 %v289
    %379 = vmatpush.bf16.msra.mxu0 %v288
    %380 = vmatpush.bf16.msra.mxu0 %v287
    %381 = vmatmul.bf16.gmra.mxu0 %v129
    %v382 = vpop.f32.mrf.mxu0
    %v383 = vadd.f32 %v364, %v382
    %v384 = vpop.f32.mrf.mxu0
    %v385 = vadd.f32 %v366, %v384
    %386 = vmatmul.bf16.gmra.mxu0 %v133
    %v387 = vpop.f32.mrf.mxu0
    %v388 = vadd.f32 %v369, %v387
    %v389 = vpop.f32.mrf.mxu0
    %v390 = vadd.f32 %v371, %v389
    %391 = vdwg.mxu0
    %392 = vmatpush.bf16.msra.mxu0 %v302
    %393 = vmatpush.bf16.msra.mxu0 %v301
    %394 = vmatpush.bf16.msra.mxu0 %v300
    %395 = vmatpush.bf16.msra.mxu0 %v299
    %396 = vmatpush.bf16.msra.mxu0 %v298
    %397 = vmatpush.bf16.msra.mxu0 %v297
    %398 = vmatpush.bf16.msra.mxu0 %v296
    %399 = vmatpush.bf16.msra.mxu0 %v295
    %400 = vmatmul.bf16.gmra.mxu0 %v130
    %v401 = vpop.f32.mrf.mxu0
    %v402 = vadd.f32 %v383, %v401
    %v403 = vpop.f32.mrf.mxu0
    %v404 = vadd.f32 %v385, %v403
    %405 = vmatmul.bf16.gmra.mxu0 %v134
    %v406 = vpop.f32.mrf.mxu0
    %v407 = vadd.f32 %v388, %v406
    %v408 = vpop.f32.mrf.mxu0
    %v409 = vadd.f32 %v390, %v408
    %410 = vdwg.mxu0
    %v411 = vadd.f32 %v402, %v404
    %v412 = vadd.f32 %v411, %v407
    %v413 = vadd.f32 %v412, %v409
    %v414 = vrot.slane %v413, 4
    %v415 = vadd.f32 %v413, %v414
    %v416 = vrot.slane %v415, 2
    %v417 = vadd.f32 %v415, %v416
    %v418 = vrot.slane %v417, 1
    %v419 = vadd.f32 %v417, %v418
    %v420 = vmul.f32 %v419, 0.03125
    %v421 = vmul.f32 %v402, %v402
    %v422 = vmul.f32 %v404, %v404
    %v423 = vmul.f32 %v407, %v407
    %v424 = vmul.f32 %v409, %v409
    %v425 = vadd.f32 %v421, %v422
    %v426 = vadd.f32 %v425, %v423
    %v427 = vadd.f32 %v426, %v424
    %v428 = vrot.slane %v427, 4
    %v429 = vadd.f32 %v427, %v428
    %v430 = vrot.slane %v429, 2
    %v431 = vadd.f32 %v429, %v430
    %v432 = vrot.slane %v431, 1
    %v433 = vadd.f32 %v431, %v432
    %v434 = vmul.f32 %v433, 0.03125
    %v435 = vmul.f32 %v420, %v420
    %v436 = vsub.f32 %v434, %v435
    %v437 = vmax.f32 %v436, 0.0
    %v438 = vld [vmem:[%s3] sm:$0x1]
    %v439 = vadd.f32 %v437, 1e-05
    %v440 = vrsqrt.pop %v439
    %v441 = vmul.f32 %v440, %v439
    %v442 = vmul.f32 %v441, %v440
    %v443 = vmul.f32 0.5, %v442
    %v444 = vsub.f32 1.5, %v443
    %v445 = vmul.f32 %v440, %v444
    %vm446 = vweird.f32 %v439
    %vm447 = vweird.f32 %v440
    %vm448 = vmor %vm446, %vm447
    %v449 = vsel %vm448, %v440, %v445
    %v450 = vmul.f32 %v438, %v449
    %v451 = vld [vmem:[%s4] sm:$0x1]
    %v452 = vmul.f32 %v420, %v450
    %v453 = vsub.f32 %v451, %v452
    %v455 = vperm.slane %v450, 0
    %v457 = vmul.f32 %v402, %v455
    %v458 = vmul.f32 %v404, %v455
    %v459 = vmul.f32 %v407, %v455
    %v460 = vmul.f32 %v409, %v455
    %v462 = vperm.slane %v453, 0
    %v464 = vadd.f32 %v457, %v462
    %v465 = vadd.f32 %v458, %v462
    %v466 = vadd.f32 %v459, %v462
    %v467 = vadd.f32 %v460, %v462
    %vm468 = vcmp.gt.f32.partialorder %v464, 0.0
    %vm469 = vcmp.gt.f32.partialorder %v465, 0.0
    %vm470 = vcmp.gt.f32.partialorder %v466, 0.0
    %vm471 = vcmp.gt.f32.partialorder %v467, 0.0
    %v472 = vmul.f32 %v464, 0.2
    %v473 = vmul.f32 %v465, 0.2
    %v474 = vmul.f32 %v466, 0.2
    %v475 = vmul.f32 %v467, 0.2
    %v476 = vsel %vm468, %v464, %v472
    %v477 = vsel %vm469, %v465, %v473
    %v478 = vsel %vm470, %v466, %v474
    %v479 = vsel %vm471, %v467, %v475
    %v480 = vpack.c.bf16 %v476, %v476
    %v481 = vpack.c.bf16 %v477, %v477
    %v482 = vpack.c.bf16 %v478, %v478
    %v483 = vpack.c.bf16 %v479, %v479
    %v484 = vld [vmem:[%s5] sm:$0xf]
    %v485 = vld [vmem:[%s5 + $0x4] sm:$0xf]
    %v486 = vld [vmem:[%s5 + $0x8] sm:$0xf]
    %v487 = vld [vmem:[%s5 + $0xc] sm:$0xf]
    %v488 = vld [vmem:[%s5 + $0x10] sm:$0xf]
    %v489 = vld [vmem:[%s5 + $0x14] sm:$0xf]
    %v490 = vld [vmem:[%s5 + $0x18] sm:$0xf]
    %v491 = vld [vmem:[%s5 + $0x1c] sm:$0xf]
    %v492 = vld [vmem:[%s5 + $0x20] sm:$0xf]
    %v493 = vld [vmem:[%s5 + $0x24] sm:$0xf]
    %v494 = vld [vmem:[%s5 + $0x28] sm:$0xf]
    %v495 = vld [vmem:[%s5 + $0x2c] sm:$0xf]
    %v496 = vld [vmem:[%s5 + $0x30] sm:$0xf]
    %v497 = vld [vmem:[%s5 + $0x34] sm:$0xf]
    %v498 = vld [vmem:[%s5 + $0x38] sm:$0xf]
    %v499 = vld [vmem:[%s5 + $0x3c] sm:$0xf]
    %v500 = vld [vmem:[%s5 + $0x40] sm:$0xf]
    %v501 = vld [vmem:[%s5 + $0x44] sm:$0xf]
    %v502 = vld [vmem:[%s5 + $0x48] sm:$0xf]
    %v503 = vld [vmem:[%s5 + $0x4c] sm:$0xf]
    %v504 = vld [vmem:[%s5 + $0x50] sm:$0xf]
    %v505 = vld [vmem:[%s5 + $0x54] sm:$0xf]
    %v506 = vld [vmem:[%s5 + $0x58] sm:$0xf]
    %v507 = vld [vmem:[%s5 + $0x5c] sm:$0xf]
    %v508 = vld [vmem:[%s5 + $0x60] sm:$0xf]
    %v509 = vld [vmem:[%s5 + $0x64] sm:$0xf]
    %v510 = vld [vmem:[%s5 + $0x68] sm:$0xf]
    %v511 = vld [vmem:[%s5 + $0x6c] sm:$0xf]
    %v512 = vld [vmem:[%s5 + $0x70] sm:$0xf]
    %v513 = vld [vmem:[%s5 + $0x74] sm:$0xf]
    %v514 = vld [vmem:[%s5 + $0x78] sm:$0xf]
    %v515 = vld [vmem:[%s5 + $0x7c] sm:$0xf]
    %v517 = vunpack.c.l.b16 %v480
    %v518 = vpack.c.b16 %v517, %v517
    %v519 = vrot.slane %v518, 1
    %v537 = vunpack.c.l.b16 %v500
    %v538 = vunpack.c.l.b16 %v501
    %v539 = vunpack.c.l.b16 %v502
    %v540 = vunpack.c.l.b16 %v503
    %v541 = vunpack.c.l.b16 %v504
    %v542 = vunpack.c.l.b16 %v505
    %v543 = vunpack.c.l.b16 %v506
    %v544 = vunpack.c.l.b16 %v507
    %v545 = vunpack.c.l.b16 %v508
    %v546 = vunpack.c.l.b16 %v509
    %v547 = vunpack.c.l.b16 %v510
    %v548 = vunpack.c.l.b16 %v511
    %v549 = vunpack.c.l.b16 %v512
    %v550 = vunpack.c.l.b16 %v513
    %v551 = vunpack.c.l.b16 %v514
    %v552 = vunpack.c.l.b16 %v515
    %v553 = vpack.c.b16 %v538, %v537
    %v554 = vpack.c.b16 %v540, %v539
    %v555 = vpack.c.b16 %v542, %v541
    %v556 = vpack.c.b16 %v544, %v543
    %v557 = vpack.c.b16 %v546, %v545
    %v558 = vpack.c.b16 %v548, %v547
    %v559 = vpack.c.b16 %v550, %v549
    %v560 = vpack.c.b16 %v552, %v551
    %569 = vmatpush.bf16.msra.mxu0 %v560
    %570 = vmatpush.bf16.msra.mxu0 %v559
    %571 = vmatpush.bf16.msra.mxu0 %v558
    %572 = vmatpush.bf16.msra.mxu0 %v557
    %573 = vmatpush.bf16.msra.mxu0 %v556
    %574 = vmatpush.bf16.msra.mxu0 %v555
    %575 = vmatpush.bf16.msra.mxu0 %v554
    %576 = vmatpush.bf16.msra.mxu0 %v553
    %577 = vmatmul.bf16.gmra.mxu0 %v519
    %v578 = vpop.f32.mrf.mxu0
    %v579 = vadd.f32 0.0, %v578
    %v580 = vpop.f32.mrf.mxu0
    %581 = vdwg.mxu0
    %v598 = vunpack.c.l.b16 %v484
    %v599 = vunpack.c.l.b16 %v485
    %v600 = vunpack.c.l.b16 %v486
    %v601 = vunpack.c.l.b16 %v487
    %v602 = vunpack.c.l.b16 %v488
    %v603 = vunpack.c.l.b16 %v489
    %v604 = vunpack.c.l.b16 %v490
    %v605 = vunpack.c.l.b16 %v491
    %v606 = vunpack.c.l.b16 %v492
    %v607 = vunpack.c.l.b16 %v493
    %v608 = vunpack.c.l.b16 %v494
    %v609 = vunpack.c.l.b16 %v495
    %v610 = vunpack.c.l.b16 %v496
    %v611 = vunpack.c.l.b16 %v497
    %v612 = vunpack.c.l.b16 %v498
    %v613 = vunpack.c.l.b16 %v499
    %v614 = vpack.c.b16 %v599, %v598
    %v615 = vpack.c.b16 %v601, %v600
    %v616 = vpack.c.b16 %v603, %v602
    %v617 = vpack.c.b16 %v605, %v604
    %v618 = vpack.c.b16 %v607, %v606
    %v619 = vpack.c.b16 %v609, %v608
    %v620 = vpack.c.b16 %v611, %v610
    %v621 = vpack.c.b16 %v613, %v612
    %630 = vmatpush.bf16.msra.mxu0 %v621
    %631 = vmatpush.bf16.msra.mxu0 %v620
    %632 = vmatpush.bf16.msra.mxu0 %v619
    %633 = vmatpush.bf16.msra.mxu0 %v618
    %634 = vmatpush.bf16.msra.mxu0 %v617
    %635 = vmatpush.bf16.msra.mxu0 %v616
    %636 = vmatpush.bf16.msra.mxu0 %v615
    %637 = vmatpush.bf16.msra.mxu0 %v614
    %638 = vmatmul.bf16.gmra.mxu0 %v480
    %v639 = vpop.f32.mrf.mxu0
    %v640 = vadd.f32 %v579, %v639
    %v641 = vpop.f32.mrf.mxu0
    %642 = vdwg.mxu0
    %v643 = vld [vmem:[%s5 + $0x80] sm:$0xf]
    %v644 = vld [vmem:[%s5 + $0x84] sm:$0xf]
    %v645 = vld [vmem:[%s5 + $0x88] sm:$0xf]
    %v646 = vld [vmem:[%s5 + $0x8c] sm:$0xf]
    %v647 = vld [vmem:[%s5 + $0x90] sm:$0xf]
    %v648 = vld [vmem:[%s5 + $0x94] sm:$0xf]
    %v649 = vld [vmem:[%s5 + $0x98] sm:$0xf]
    %v650 = vld [vmem:[%s5 + $0x9c] sm:$0xf]
    %v651 = vld [vmem:[%s5 + $0xa0] sm:$0xf]
    %v652 = vld [vmem:[%s5 + $0xa4] sm:$0xf]
    %v653 = vld [vmem:[%s5 + $0xa8] sm:$0xf]
    %v654 = vld [vmem:[%s5 + $0xac] sm:$0xf]
    %v655 = vld [vmem:[%s5 + $0xb0] sm:$0xf]
    %v656 = vld [vmem:[%s5 + $0xb4] sm:$0xf]
    %v657 = vld [vmem:[%s5 + $0xb8] sm:$0xf]
    %v658 = vld [vmem:[%s5 + $0xbc] sm:$0xf]
    %v659 = vrot.slane %v518, 2
    %v677 = vunpack.c.l.b16 %v643
    %v678 = vunpack.c.l.b16 %v644
    %v679 = vunpack.c.l.b16 %v645
    %v680 = vunpack.c.l.b16 %v646
    %v681 = vunpack.c.l.b16 %v647
    %v682 = vunpack.c.l.b16 %v648
    %v683 = vunpack.c.l.b16 %v649
    %v684 = vunpack.c.l.b16 %v650
    %v685 = vunpack.c.l.b16 %v651
    %v686 = vunpack.c.l.b16 %v652
    %v687 = vunpack.c.l.b16 %v653
    %v688 = vunpack.c.l.b16 %v654
    %v689 = vunpack.c.l.b16 %v655
    %v690 = vunpack.c.l.b16 %v656
    %v691 = vunpack.c.l.b16 %v657
    %v692 = vunpack.c.l.b16 %v658
    %v693 = vpack.c.b16 %v678, %v677
    %v694 = vpack.c.b16 %v680, %v679
    %v695 = vpack.c.b16 %v682, %v681
    %v696 = vpack.c.b16 %v684, %v683
    %v697 = vpack.c.b16 %v686, %v685
    %v698 = vpack.c.b16 %v688, %v687
    %v699 = vpack.c.b16 %v690, %v689
    %v700 = vpack.c.b16 %v692, %v691
    %709 = vmatpush.bf16.msra.mxu0 %v700
    %710 = vmatpush.bf16.msra.mxu0 %v699
    %711 = vmatpush.bf16.msra.mxu0 %v698
    %712 = vmatpush.bf16.msra.mxu0 %v697
    %713 = vmatpush.bf16.msra.mxu0 %v696
    %714 = vmatpush.bf16.msra.mxu0 %v695
    %715 = vmatpush.bf16.msra.mxu0 %v694
    %716 = vmatpush.bf16.msra.mxu0 %v693
    %717 = vmatmul.bf16.gmra.mxu0 %v659
    %v718 = vpop.f32.mrf.mxu0
    %v719 = vadd.f32 0.0, %v718
    %v720 = vpop.f32.mrf.mxu0
    %721 = vdwg.mxu0
    %v722 = vadd.f32 %v640, %v719
    %v723 = vld [vmem:[%s5 + $0xc0] sm:$0xf]
    %v724 = vld [vmem:[%s5 + $0xc4] sm:$0xf]
    %v725 = vld [vmem:[%s5 + $0xc8] sm:$0xf]
    %v726 = vld [vmem:[%s5 + $0xcc] sm:$0xf]
    %v727 = vld [vmem:[%s5 + $0xd0] sm:$0xf]
    %v728 = vld [vmem:[%s5 + $0xd4] sm:$0xf]
    %v729 = vld [vmem:[%s5 + $0xd8] sm:$0xf]
    %v730 = vld [vmem:[%s5 + $0xdc] sm:$0xf]
    %v731 = vld [vmem:[%s5 + $0xe0] sm:$0xf]
    %v732 = vld [vmem:[%s5 + $0xe4] sm:$0xf]
    %v733 = vld [vmem:[%s5 + $0xe8] sm:$0xf]
    %v734 = vld [vmem:[%s5 + $0xec] sm:$0xf]
    %v735 = vld [vmem:[%s5 + $0xf0] sm:$0xf]
    %v736 = vld [vmem:[%s5 + $0xf4] sm:$0xf]
    %v737 = vld [vmem:[%s5 + $0xf8] sm:$0xf]
    %v738 = vld [vmem:[%s5 + $0xfc] sm:$0xf]
    %v739 = vrot.slane %v518, 3
    %v757 = vunpack.c.l.b16 %v723
    %v758 = vunpack.c.l.b16 %v724
    %v759 = vunpack.c.l.b16 %v725
    %v760 = vunpack.c.l.b16 %v726
    %v761 = vunpack.c.l.b16 %v727
    %v762 = vunpack.c.l.b16 %v728
    %v763 = vunpack.c.l.b16 %v729
    %v764 = vunpack.c.l.b16 %v730
    %v765 = vunpack.c.l.b16 %v731
    %v766 = vunpack.c.l.b16 %v732
    %v767 = vunpack.c.l.b16 %v733
    %v768 = vunpack.c.l.b16 %v734
    %v769 = vunpack.c.l.b16 %v735
    %v770 = vunpack.c.l.b16 %v736
    %v771 = vunpack.c.l.b16 %v737
    %v772 = vunpack.c.l.b16 %v738
    %v773 = vpack.c.b16 %v758, %v757
    %v774 = vpack.c.b16 %v760, %v759
    %v775 = vpack.c.b16 %v762, %v761
    %v776 = vpack.c.b16 %v764, %v763
    %v777 = vpack.c.b16 %v766, %v765
    %v778 = vpack.c.b16 %v768, %v767
    %v779 = vpack.c.b16 %v770, %v769
    %v780 = vpack.c.b16 %v772, %v771
    %789 = vmatpush.bf16.msra.mxu0 %v780
    %790 = vmatpush.bf16.msra.mxu0 %v779
    %791 = vmatpush.bf16.msra.mxu0 %v778
    %792 = vmatpush.bf16.msra.mxu0 %v777
    %793 = vmatpush.bf16.msra.mxu0 %v776
    %794 = vmatpush.bf16.msra.mxu0 %v775
    %795 = vmatpush.bf16.msra.mxu0 %v774
    %796 = vmatpush.bf16.msra.mxu0 %v773
    %797 = vmatmul.bf16.gmra.mxu0 %v739
    %v798 = vpop.f32.mrf.mxu0
    %v799 = vadd.f32 0.0, %v798
    %v800 = vpop.f32.mrf.mxu0
    %801 = vdwg.mxu0
    %v802 = vadd.f32 %v722, %v799
    %v803 = vld [vmem:[%s5 + $0x100] sm:$0xf]
    %v804 = vld [vmem:[%s5 + $0x104] sm:$0xf]
    %v805 = vld [vmem:[%s5 + $0x108] sm:$0xf]
    %v806 = vld [vmem:[%s5 + $0x10c] sm:$0xf]
    %v807 = vld [vmem:[%s5 + $0x110] sm:$0xf]
    %v808 = vld [vmem:[%s5 + $0x114] sm:$0xf]
    %v809 = vld [vmem:[%s5 + $0x118] sm:$0xf]
    %v810 = vld [vmem:[%s5 + $0x11c] sm:$0xf]
    %v811 = vld [vmem:[%s5 + $0x120] sm:$0xf]
    %v812 = vld [vmem:[%s5 + $0x124] sm:$0xf]
    %v813 = vld [vmem:[%s5 + $0x128] sm:$0xf]
    %v814 = vld [vmem:[%s5 + $0x12c] sm:$0xf]
    %v815 = vld [vmem:[%s5 + $0x130] sm:$0xf]
    %v816 = vld [vmem:[%s5 + $0x134] sm:$0xf]
    %v817 = vld [vmem:[%s5 + $0x138] sm:$0xf]
    %v818 = vld [vmem:[%s5 + $0x13c] sm:$0xf]
    %v835 = vunpack.c.l.b16 %v803
    %v836 = vunpack.c.l.b16 %v804
    %v837 = vunpack.c.l.b16 %v805
    %v838 = vunpack.c.l.b16 %v806
    %v839 = vunpack.c.l.b16 %v807
    %v840 = vunpack.c.l.b16 %v808
    %v841 = vunpack.c.l.b16 %v809
    %v842 = vunpack.c.l.b16 %v810
    %v843 = vunpack.c.l.b16 %v811
    %v844 = vunpack.c.l.b16 %v812
    %v845 = vunpack.c.l.b16 %v813
    %v846 = vunpack.c.l.b16 %v814
    %v847 = vunpack.c.l.b16 %v815
    %v848 = vunpack.c.l.b16 %v816
    %v849 = vunpack.c.l.b16 %v817
    %v850 = vunpack.c.l.b16 %v818
    %v851 = vpack.c.b16 %v836, %v835
    %v852 = vpack.c.b16 %v838, %v837
    %v853 = vpack.c.b16 %v840, %v839
    %v854 = vpack.c.b16 %v842, %v841
    %v855 = vpack.c.b16 %v844, %v843
    %v856 = vpack.c.b16 %v846, %v845
    %v857 = vpack.c.b16 %v848, %v847
    %v858 = vpack.c.b16 %v850, %v849
    %867 = vmatpush.bf16.msra.mxu0 %v858
    %868 = vmatpush.bf16.msra.mxu0 %v857
    %869 = vmatpush.bf16.msra.mxu0 %v856
    %870 = vmatpush.bf16.msra.mxu0 %v855
    %871 = vmatpush.bf16.msra.mxu0 %v854
    %872 = vmatpush.bf16.msra.mxu0 %v853
    %873 = vmatpush.bf16.msra.mxu0 %v852
    %874 = vmatpush.bf16.msra.mxu0 %v851
    %875 = vmatmul.bf16.gmra.mxu0 %v481
    %v876 = vpop.f32.mrf.mxu0
    %v877 = vadd.f32 0.0, %v876
    %v878 = vpop.f32.mrf.mxu0
    %879 = vdwg.mxu0
    %v880 = vadd.f32 %v802, %v877
    %v881 = vld [vmem:[%s5 + $0x140] sm:$0xf]
    %v882 = vld [vmem:[%s5 + $0x144] sm:$0xf]
    %v883 = vld [vmem:[%s5 + $0x148] sm:$0xf]
    %v884 = vld [vmem:[%s5 + $0x14c] sm:$0xf]
    %v885 = vld [vmem:[%s5 + $0x150] sm:$0xf]
    %v886 = vld [vmem:[%s5 + $0x154] sm:$0xf]
    %v887 = vld [vmem:[%s5 + $0x158] sm:$0xf]
    %v888 = vld [vmem:[%s5 + $0x15c] sm:$0xf]
    %v889 = vld [vmem:[%s5 + $0x160] sm:$0xf]
    %v890 = vld [vmem:[%s5 + $0x164] sm:$0xf]
    %v891 = vld [vmem:[%s5 + $0x168] sm:$0xf]
    %v892 = vld [vmem:[%s5 + $0x16c] sm:$0xf]
    %v893 = vld [vmem:[%s5 + $0x170] sm:$0xf]
    %v894 = vld [vmem:[%s5 + $0x174] sm:$0xf]
    %v895 = vld [vmem:[%s5 + $0x178] sm:$0xf]
    %v896 = vld [vmem:[%s5 + $0x17c] sm:$0xf]
    %v898 = vunpack.c.l.b16 %v481
    %v899 = vpack.c.b16 %v898, %v898
    %v900 = vrot.slane %v899, 1
    %v918 = vunpack.c.l.b16 %v881
    %v919 = vunpack.c.l.b16 %v882
    %v920 = vunpack.c.l.b16 %v883
    %v921 = vunpack.c.l.b16 %v884
    %v922 = vunpack.c.l.b16 %v885
    %v923 = vunpack.c.l.b16 %v886
    %v924 = vunpack.c.l.b16 %v887
    %v925 = vunpack.c.l.b16 %v888
    %v926 = vunpack.c.l.b16 %v889
    %v927 = vunpack.c.l.b16 %v890
    %v928 = vunpack.c.l.b16 %v891
    %v929 = vunpack.c.l.b16 %v892
    %v930 = vunpack.c.l.b16 %v893
    %v931 = vunpack.c.l.b16 %v894
    %v932 = vunpack.c.l.b16 %v895
    %v933 = vunpack.c.l.b16 %v896
    %v934 = vpack.c.b16 %v919, %v918
    %v935 = vpack.c.b16 %v921, %v920
    %v936 = vpack.c.b16 %v923, %v922
    %v937 = vpack.c.b16 %v925, %v924
    %v938 = vpack.c.b16 %v927, %v926
    %v939 = vpack.c.b16 %v929, %v928
    %v940 = vpack.c.b16 %v931, %v930
    %v941 = vpack.c.b16 %v933, %v932
    %950 = vmatpush.bf16.msra.mxu0 %v941
    %951 = vmatpush.bf16.msra.mxu0 %v940
    %952 = vmatpush.bf16.msra.mxu0 %v939
    %953 = vmatpush.bf16.msra.mxu0 %v938
    %954 = vmatpush.bf16.msra.mxu0 %v937
    %955 = vmatpush.bf16.msra.mxu0 %v936
    %956 = vmatpush.bf16.msra.mxu0 %v935
    %957 = vmatpush.bf16.msra.mxu0 %v934
    %958 = vmatmul.bf16.gmra.mxu0 %v900
    %v959 = vpop.f32.mrf.mxu0
    %v960 = vadd.f32 0.0, %v959
    %v961 = vpop.f32.mrf.mxu0
    %962 = vdwg.mxu0
    %v963 = vadd.f32 %v880, %v960
    %v964 = vld [vmem:[%s5 + $0x180] sm:$0xf]
    %v965 = vld [vmem:[%s5 + $0x184] sm:$0xf]
    %v966 = vld [vmem:[%s5 + $0x188] sm:$0xf]
    %v967 = vld [vmem:[%s5 + $0x18c] sm:$0xf]
    %v968 = vld [vmem:[%s5 + $0x190] sm:$0xf]
    %v969 = vld [vmem:[%s5 + $0x194] sm:$0xf]
    %v970 = vld [vmem:[%s5 + $0x198] sm:$0xf]
    %v971 = vld [vmem:[%s5 + $0x19c] sm:$0xf]
    %v972 = vld [vmem:[%s5 + $0x1a0] sm:$0xf]
    %v973 = vld [vmem:[%s5 + $0x1a4] sm:$0xf]
    %v974 = vld [vmem:[%s5 + $0x1a8] sm:$0xf]
    %v975 = vld [vmem:[%s5 + $0x1ac] sm:$0xf]
    %v976 = vld [vmem:[%s5 + $0x1b0] sm:$0xf]
    %v977 = vld [vmem:[%s5 + $0x1b4] sm:$0xf]
    %v978 = vld [vmem:[%s5 + $0x1b8] sm:$0xf]
    %v979 = vld [vmem:[%s5 + $0x1bc] sm:$0xf]
    %v980 = vrot.slane %v899, 2
    %v998 = vunpack.c.l.b16 %v964
    %v999 = vunpack.c.l.b16 %v965
    %v1000 = vunpack.c.l.b16 %v966
    %v1001 = vunpack.c.l.b16 %v967
    %v1002 = vunpack.c.l.b16 %v968
    %v1003 = vunpack.c.l.b16 %v969
    %v1004 = vunpack.c.l.b16 %v970
    %v1005 = vunpack.c.l.b16 %v971
    %v1006 = vunpack.c.l.b16 %v972
    %v1007 = vunpack.c.l.b16 %v973
    %v1008 = vunpack.c.l.b16 %v974
    %v1009 = vunpack.c.l.b16 %v975
    %v1010 = vunpack.c.l.b16 %v976
    %v1011 = vunpack.c.l.b16 %v977
    %v1012 = vunpack.c.l.b16 %v978
    %v1013 = vunpack.c.l.b16 %v979
    %v1014 = vpack.c.b16 %v999, %v998
    %v1015 = vpack.c.b16 %v1001, %v1000
    %v1016 = vpack.c.b16 %v1003, %v1002
    %v1017 = vpack.c.b16 %v1005, %v1004
    %v1018 = vpack.c.b16 %v1007, %v1006
    %v1019 = vpack.c.b16 %v1009, %v1008
    %v1020 = vpack.c.b16 %v1011, %v1010
    %v1021 = vpack.c.b16 %v1013, %v1012
    %1030 = vmatpush.bf16.msra.mxu0 %v1021
    %1031 = vmatpush.bf16.msra.mxu0 %v1020
    %1032 = vmatpush.bf16.msra.mxu0 %v1019
    %1033 = vmatpush.bf16.msra.mxu0 %v1018
    %1034 = vmatpush.bf16.msra.mxu0 %v1017
    %1035 = vmatpush.bf16.msra.mxu0 %v1016
    %1036 = vmatpush.bf16.msra.mxu0 %v1015
    %1037 = vmatpush.bf16.msra.mxu0 %v1014
    %1038 = vmatmul.bf16.gmra.mxu0 %v980
    %v1039 = vpop.f32.mrf.mxu0
    %v1040 = vadd.f32 0.0, %v1039
    %v1041 = vpop.f32.mrf.mxu0
    %1042 = vdwg.mxu0
    %v1043 = vadd.f32 %v963, %v1040
    %v1044 = vld [vmem:[%s5 + $0x1c0] sm:$0xf]
    %v1045 = vld [vmem:[%s5 + $0x1c4] sm:$0xf]
    %v1046 = vld [vmem:[%s5 + $0x1c8] sm:$0xf]
    %v1047 = vld [vmem:[%s5 + $0x1cc] sm:$0xf]
    %v1048 = vld [vmem:[%s5 + $0x1d0] sm:$0xf]
    %v1049 = vld [vmem:[%s5 + $0x1d4] sm:$0xf]
    %v1050 = vld [vmem:[%s5 + $0x1d8] sm:$0xf]
    %v1051 = vld [vmem:[%s5 + $0x1dc] sm:$0xf]
    %v1052 = vld [vmem:[%s5 + $0x1e0] sm:$0xf]
    %v1053 = vld [vmem:[%s5 + $0x1e4] sm:$0xf]
    %v1054 = vld [vmem:[%s5 + $0x1e8] sm:$0xf]
    %v1055 = vld [vmem:[%s5 + $0x1ec] sm:$0xf]
    %v1056 = vld [vmem:[%s5 + $0x1f0] sm:$0xf]
    %v1057 = vld [vmem:[%s5 + $0x1f4] sm:$0xf]
    %v1058 = vld [vmem:[%s5 + $0x1f8] sm:$0xf]
    %v1059 = vld [vmem:[%s5 + $0x1fc] sm:$0xf]
    %v1060 = vrot.slane %v899, 3
    %v1078 = vunpack.c.l.b16 %v1044
    %v1079 = vunpack.c.l.b16 %v1045
    %v1080 = vunpack.c.l.b16 %v1046
    %v1081 = vunpack.c.l.b16 %v1047
    %v1082 = vunpack.c.l.b16 %v1048
    %v1083 = vunpack.c.l.b16 %v1049
    %v1084 = vunpack.c.l.b16 %v1050
    %v1085 = vunpack.c.l.b16 %v1051
    %v1086 = vunpack.c.l.b16 %v1052
    %v1087 = vunpack.c.l.b16 %v1053
    %v1088 = vunpack.c.l.b16 %v1054
    %v1089 = vunpack.c.l.b16 %v1055
    %v1090 = vunpack.c.l.b16 %v1056
    %v1091 = vunpack.c.l.b16 %v1057
    %v1092 = vunpack.c.l.b16 %v1058
    %v1093 = vunpack.c.l.b16 %v1059
    %v1094 = vpack.c.b16 %v1079, %v1078
    %v1095 = vpack.c.b16 %v1081, %v1080
    %v1096 = vpack.c.b16 %v1083, %v1082
    %v1097 = vpack.c.b16 %v1085, %v1084
    %v1098 = vpack.c.b16 %v1087, %v1086
    %v1099 = vpack.c.b16 %v1089, %v1088
    %v1100 = vpack.c.b16 %v1091, %v1090
    %v1101 = vpack.c.b16 %v1093, %v1092
    %1110 = vmatpush.bf16.msra.mxu0 %v1101
    %1111 = vmatpush.bf16.msra.mxu0 %v1100
    %1112 = vmatpush.bf16.msra.mxu0 %v1099
    %1113 = vmatpush.bf16.msra.mxu0 %v1098
    %1114 = vmatpush.bf16.msra.mxu0 %v1097
    %1115 = vmatpush.bf16.msra.mxu0 %v1096
    %1116 = vmatpush.bf16.msra.mxu0 %v1095
    %1117 = vmatpush.bf16.msra.mxu0 %v1094
    %1118 = vmatmul.bf16.gmra.mxu0 %v1060
    %v1119 = vpop.f32.mrf.mxu0
    %v1120 = vadd.f32 0.0, %v1119
    %v1121 = vpop.f32.mrf.mxu0
    %1122 = vdwg.mxu0
    %v1123 = vadd.f32 %v1043, %v1120
    %v1124 = vld [vmem:[%s5 + $0x200] sm:$0xf]
    %v1125 = vld [vmem:[%s5 + $0x204] sm:$0xf]
    %v1126 = vld [vmem:[%s5 + $0x208] sm:$0xf]
    %v1127 = vld [vmem:[%s5 + $0x20c] sm:$0xf]
    %v1128 = vld [vmem:[%s5 + $0x210] sm:$0xf]
    %v1129 = vld [vmem:[%s5 + $0x214] sm:$0xf]
    %v1130 = vld [vmem:[%s5 + $0x218] sm:$0xf]
    %v1131 = vld [vmem:[%s5 + $0x21c] sm:$0xf]
    %v1132 = vld [vmem:[%s5 + $0x220] sm:$0xf]
    %v1133 = vld [vmem:[%s5 + $0x224] sm:$0xf]
    %v1134 = vld [vmem:[%s5 + $0x228] sm:$0xf]
    %v1135 = vld [vmem:[%s5 + $0x22c] sm:$0xf]
    %v1136 = vld [vmem:[%s5 + $0x230] sm:$0xf]
    %v1137 = vld [vmem:[%s5 + $0x234] sm:$0xf]
    %v1138 = vld [vmem:[%s5 + $0x238] sm:$0xf]
    %v1139 = vld [vmem:[%s5 + $0x23c] sm:$0xf]
    %v1156 = vunpack.c.l.b16 %v1124
    %v1157 = vunpack.c.l.b16 %v1125
    %v1158 = vunpack.c.l.b16 %v1126
    %v1159 = vunpack.c.l.b16 %v1127
    %v1160 = vunpack.c.l.b16 %v1128
    %v1161 = vunpack.c.l.b16 %v1129
    %v1162 = vunpack.c.l.b16 %v1130
    %v1163 = vunpack.c.l.b16 %v1131
    %v1164 = vunpack.c.l.b16 %v1132
    %v1165 = vunpack.c.l.b16 %v1133
    %v1166 = vunpack.c.l.b16 %v1134
    %v1167 = vunpack.c.l.b16 %v1135
    %v1168 = vunpack.c.l.b16 %v1136
    %v1169 = vunpack.c.l.b16 %v1137
    %v1170 = vunpack.c.l.b16 %v1138
    %v1171 = vunpack.c.l.b16 %v1139
    %v1172 = vpack.c.b16 %v1157, %v1156
    %v1173 = vpack.c.b16 %v1159, %v1158
    %v1174 = vpack.c.b16 %v1161, %v1160
    %v1175 = vpack.c.b16 %v1163, %v1162
    %v1176 = vpack.c.b16 %v1165, %v1164
    %v1177 = vpack.c.b16 %v1167, %v1166
    %v1178 = vpack.c.b16 %v1169, %v1168
    %v1179 = vpack.c.b16 %v1171, %v1170
    %1188 = vmatpush.bf16.msra.mxu0 %v1179
    %1189 = vmatpush.bf16.msra.mxu0 %v1178
    %1190 = vmatpush.bf16.msra.mxu0 %v1177
    %1191 = vmatpush.bf16.msra.mxu0 %v1176
    %1192 = vmatpush.bf16.msra.mxu0 %v1175
    %1193 = vmatpush.bf16.msra.mxu0 %v1174
    %1194 = vmatpush.bf16.msra.mxu0 %v1173
    %1195 = vmatpush.bf16.msra.mxu0 %v1172
    %1196 = vmatmul.bf16.gmra.mxu0 %v482
    %v1197 = vpop.f32.mrf.mxu0
    %v1198 = vadd.f32 0.0, %v1197
    %v1199 = vpop.f32.mrf.mxu0
    %1200 = vdwg.mxu0
    %v1201 = vadd.f32 %v1123, %v1198
    %v1202 = vld [vmem:[%s5 + $0x240] sm:$0xf]
    %v1203 = vld [vmem:[%s5 + $0x244] sm:$0xf]
    %v1204 = vld [vmem:[%s5 + $0x248] sm:$0xf]
    %v1205 = vld [vmem:[%s5 + $0x24c] sm:$0xf]
    %v1206 = vld [vmem:[%s5 + $0x250] sm:$0xf]
    %v1207 = vld [vmem:[%s5 + $0x254] sm:$0xf]
    %v1208 = vld [vmem:[%s5 + $0x258] sm:$0xf]
    %v1209 = vld [vmem:[%s5 + $0x25c] sm:$0xf]
    %v1210 = vld [vmem:[%s5 + $0x260] sm:$0xf]
    %v1211 = vld [vmem:[%s5 + $0x264] sm:$0xf]
    %v1212 = vld [vmem:[%s5 + $0x268] sm:$0xf]
    %v1213 = vld [vmem:[%s5 + $0x26c] sm:$0xf]
    %v1214 = vld [vmem:[%s5 + $0x270] sm:$0xf]
    %v1215 = vld [vmem:[%s5 + $0x274] sm:$0xf]
    %v1216 = vld [vmem:[%s5 + $0x278] sm:$0xf]
    %v1217 = vld [vmem:[%s5 + $0x27c] sm:$0xf]
    %v1219 = vunpack.c.l.b16 %v482
    %v1220 = vpack.c.b16 %v1219, %v1219
    %v1221 = vrot.slane %v1220, 1
    %v1239 = vunpack.c.l.b16 %v1202
    %v1240 = vunpack.c.l.b16 %v1203
    %v1241 = vunpack.c.l.b16 %v1204
    %v1242 = vunpack.c.l.b16 %v1205
    %v1243 = vunpack.c.l.b16 %v1206
    %v1244 = vunpack.c.l.b16 %v1207
    %v1245 = vunpack.c.l.b16 %v1208
    %v1246 = vunpack.c.l.b16 %v1209
    %v1247 = vunpack.c.l.b16 %v1210
    %v1248 = vunpack.c.l.b16 %v1211
    %v1249 = vunpack.c.l.b16 %v1212
    %v1250 = vunpack.c.l.b16 %v1213
    %v1251 = vunpack.c.l.b16 %v1214
    %v1252 = vunpack.c.l.b16 %v1215
    %v1253 = vunpack.c.l.b16 %v1216
    %v1254 = vunpack.c.l.b16 %v1217
    %v1255 = vpack.c.b16 %v1240, %v1239
    %v1256 = vpack.c.b16 %v1242, %v1241
    %v1257 = vpack.c.b16 %v1244, %v1243
    %v1258 = vpack.c.b16 %v1246, %v1245
    %v1259 = vpack.c.b16 %v1248, %v1247
    %v1260 = vpack.c.b16 %v1250, %v1249
    %v1261 = vpack.c.b16 %v1252, %v1251
    %v1262 = vpack.c.b16 %v1254, %v1253
    %1271 = vmatpush.bf16.msra.mxu0 %v1262
    %1272 = vmatpush.bf16.msra.mxu0 %v1261
    %1273 = vmatpush.bf16.msra.mxu0 %v1260
    %1274 = vmatpush.bf16.msra.mxu0 %v1259
    %1275 = vmatpush.bf16.msra.mxu0 %v1258
    %1276 = vmatpush.bf16.msra.mxu0 %v1257
    %1277 = vmatpush.bf16.msra.mxu0 %v1256
    %1278 = vmatpush.bf16.msra.mxu0 %v1255
    %1279 = vmatmul.bf16.gmra.mxu0 %v1221
    %v1280 = vpop.f32.mrf.mxu0
    %v1281 = vadd.f32 0.0, %v1280
    %v1282 = vpop.f32.mrf.mxu0
    %1283 = vdwg.mxu0
    %v1284 = vadd.f32 %v1201, %v1281
    %v1285 = vld [vmem:[%s5 + $0x280] sm:$0xf]
    %v1286 = vld [vmem:[%s5 + $0x284] sm:$0xf]
    %v1287 = vld [vmem:[%s5 + $0x288] sm:$0xf]
    %v1288 = vld [vmem:[%s5 + $0x28c] sm:$0xf]
    %v1289 = vld [vmem:[%s5 + $0x290] sm:$0xf]
    %v1290 = vld [vmem:[%s5 + $0x294] sm:$0xf]
    %v1291 = vld [vmem:[%s5 + $0x298] sm:$0xf]
    %v1292 = vld [vmem:[%s5 + $0x29c] sm:$0xf]
    %v1293 = vld [vmem:[%s5 + $0x2a0] sm:$0xf]
    %v1294 = vld [vmem:[%s5 + $0x2a4] sm:$0xf]
    %v1295 = vld [vmem:[%s5 + $0x2a8] sm:$0xf]
    %v1296 = vld [vmem:[%s5 + $0x2ac] sm:$0xf]
    %v1297 = vld [vmem:[%s5 + $0x2b0] sm:$0xf]
    %v1298 = vld [vmem:[%s5 + $0x2b4] sm:$0xf]
    %v1299 = vld [vmem:[%s5 + $0x2b8] sm:$0xf]
    %v1300 = vld [vmem:[%s5 + $0x2bc] sm:$0xf]
    %v1301 = vrot.slane %v1220, 2
    %v1319 = vunpack.c.l.b16 %v1285
    %v1320 = vunpack.c.l.b16 %v1286
    %v1321 = vunpack.c.l.b16 %v1287
    %v1322 = vunpack.c.l.b16 %v1288
    %v1323 = vunpack.c.l.b16 %v1289
    %v1324 = vunpack.c.l.b16 %v1290
    %v1325 = vunpack.c.l.b16 %v1291
    %v1326 = vunpack.c.l.b16 %v1292
    %v1327 = vunpack.c.l.b16 %v1293
    %v1328 = vunpack.c.l.b16 %v1294
    %v1329 = vunpack.c.l.b16 %v1295
    %v1330 = vunpack.c.l.b16 %v1296
    %v1331 = vunpack.c.l.b16 %v1297
    %v1332 = vunpack.c.l.b16 %v1298
    %v1333 = vunpack.c.l.b16 %v1299
    %v1334 = vunpack.c.l.b16 %v1300
    %v1335 = vpack.c.b16 %v1320, %v1319
    %v1336 = vpack.c.b16 %v1322, %v1321
    %v1337 = vpack.c.b16 %v1324, %v1323
    %v1338 = vpack.c.b16 %v1326, %v1325
    %v1339 = vpack.c.b16 %v1328, %v1327
    %v1340 = vpack.c.b16 %v1330, %v1329
    %v1341 = vpack.c.b16 %v1332, %v1331
    %v1342 = vpack.c.b16 %v1334, %v1333
    %1351 = vmatpush.bf16.msra.mxu0 %v1342
    %1352 = vmatpush.bf16.msra.mxu0 %v1341
    %1353 = vmatpush.bf16.msra.mxu0 %v1340
    %1354 = vmatpush.bf16.msra.mxu0 %v1339
    %1355 = vmatpush.bf16.msra.mxu0 %v1338
    %1356 = vmatpush.bf16.msra.mxu0 %v1337
    %1357 = vmatpush.bf16.msra.mxu0 %v1336
    %1358 = vmatpush.bf16.msra.mxu0 %v1335
    %1359 = vmatmul.bf16.gmra.mxu0 %v1301
    %v1360 = vpop.f32.mrf.mxu0
    %v1361 = vadd.f32 0.0, %v1360
    %v1362 = vpop.f32.mrf.mxu0
    %1363 = vdwg.mxu0
    %v1364 = vadd.f32 %v1284, %v1361
    %v1365 = vld [vmem:[%s5 + $0x2c0] sm:$0xf]
    %v1366 = vld [vmem:[%s5 + $0x2c4] sm:$0xf]
    %v1367 = vld [vmem:[%s5 + $0x2c8] sm:$0xf]
    %v1368 = vld [vmem:[%s5 + $0x2cc] sm:$0xf]
    %v1369 = vld [vmem:[%s5 + $0x2d0] sm:$0xf]
    %v1370 = vld [vmem:[%s5 + $0x2d4] sm:$0xf]
    %v1371 = vld [vmem:[%s5 + $0x2d8] sm:$0xf]
    %v1372 = vld [vmem:[%s5 + $0x2dc] sm:$0xf]
    %v1373 = vld [vmem:[%s5 + $0x2e0] sm:$0xf]
    %v1374 = vld [vmem:[%s5 + $0x2e4] sm:$0xf]
    %v1375 = vld [vmem:[%s5 + $0x2e8] sm:$0xf]
    %v1376 = vld [vmem:[%s5 + $0x2ec] sm:$0xf]
    %v1377 = vld [vmem:[%s5 + $0x2f0] sm:$0xf]
    %v1378 = vld [vmem:[%s5 + $0x2f4] sm:$0xf]
    %v1379 = vld [vmem:[%s5 + $0x2f8] sm:$0xf]
    %v1380 = vld [vmem:[%s5 + $0x2fc] sm:$0xf]
    %v1381 = vrot.slane %v1220, 3
    %v1399 = vunpack.c.l.b16 %v1365
    %v1400 = vunpack.c.l.b16 %v1366
    %v1401 = vunpack.c.l.b16 %v1367
    %v1402 = vunpack.c.l.b16 %v1368
    %v1403 = vunpack.c.l.b16 %v1369
    %v1404 = vunpack.c.l.b16 %v1370
    %v1405 = vunpack.c.l.b16 %v1371
    %v1406 = vunpack.c.l.b16 %v1372
    %v1407 = vunpack.c.l.b16 %v1373
    %v1408 = vunpack.c.l.b16 %v1374
    %v1409 = vunpack.c.l.b16 %v1375
    %v1410 = vunpack.c.l.b16 %v1376
    %v1411 = vunpack.c.l.b16 %v1377
    %v1412 = vunpack.c.l.b16 %v1378
    %v1413 = vunpack.c.l.b16 %v1379
    %v1414 = vunpack.c.l.b16 %v1380
    %v1415 = vpack.c.b16 %v1400, %v1399
    %v1416 = vpack.c.b16 %v1402, %v1401
    %v1417 = vpack.c.b16 %v1404, %v1403
    %v1418 = vpack.c.b16 %v1406, %v1405
    %v1419 = vpack.c.b16 %v1408, %v1407
    %v1420 = vpack.c.b16 %v1410, %v1409
    %v1421 = vpack.c.b16 %v1412, %v1411
    %v1422 = vpack.c.b16 %v1414, %v1413
    %1431 = vmatpush.bf16.msra.mxu0 %v1422
    %1432 = vmatpush.bf16.msra.mxu0 %v1421
    %1433 = vmatpush.bf16.msra.mxu0 %v1420
    %1434 = vmatpush.bf16.msra.mxu0 %v1419
    %1435 = vmatpush.bf16.msra.mxu0 %v1418
    %1436 = vmatpush.bf16.msra.mxu0 %v1417
    %1437 = vmatpush.bf16.msra.mxu0 %v1416
    %1438 = vmatpush.bf16.msra.mxu0 %v1415
    %1439 = vmatmul.bf16.gmra.mxu0 %v1381
    %v1440 = vpop.f32.mrf.mxu0
    %v1441 = vadd.f32 0.0, %v1440
    %v1442 = vpop.f32.mrf.mxu0
    %1443 = vdwg.mxu0
    %v1444 = vadd.f32 %v1364, %v1441
    %v1445 = vld [vmem:[%s5 + $0x300] sm:$0xf]
    %v1446 = vld [vmem:[%s5 + $0x304] sm:$0xf]
    %v1447 = vld [vmem:[%s5 + $0x308] sm:$0xf]
    %v1448 = vld [vmem:[%s5 + $0x30c] sm:$0xf]
    %v1449 = vld [vmem:[%s5 + $0x310] sm:$0xf]
    %v1450 = vld [vmem:[%s5 + $0x314] sm:$0xf]
    %v1451 = vld [vmem:[%s5 + $0x318] sm:$0xf]
    %v1452 = vld [vmem:[%s5 + $0x31c] sm:$0xf]
    %v1453 = vld [vmem:[%s5 + $0x320] sm:$0xf]
    %v1454 = vld [vmem:[%s5 + $0x324] sm:$0xf]
    %v1455 = vld [vmem:[%s5 + $0x328] sm:$0xf]
    %v1456 = vld [vmem:[%s5 + $0x32c] sm:$0xf]
    %v1457 = vld [vmem:[%s5 + $0x330] sm:$0xf]
    %v1458 = vld [vmem:[%s5 + $0x334] sm:$0xf]
    %v1459 = vld [vmem:[%s5 + $0x338] sm:$0xf]
    %v1460 = vld [vmem:[%s5 + $0x33c] sm:$0xf]
    %v1477 = vunpack.c.l.b16 %v1445
    %v1478 = vunpack.c.l.b16 %v1446
    %v1479 = vunpack.c.l.b16 %v1447
    %v1480 = vunpack.c.l.b16 %v1448
    %v1481 = vunpack.c.l.b16 %v1449
    %v1482 = vunpack.c.l.b16 %v1450
    %v1483 = vunpack.c.l.b16 %v1451
    %v1484 = vunpack.c.l.b16 %v1452
    %v1485 = vunpack.c.l.b16 %v1453
    %v1486 = vunpack.c.l.b16 %v1454
    %v1487 = vunpack.c.l.b16 %v1455
    %v1488 = vunpack.c.l.b16 %v1456
    %v1489 = vunpack.c.l.b16 %v1457
    %v1490 = vunpack.c.l.b16 %v1458
    %v1491 = vunpack.c.l.b16 %v1459
    %v1492 = vunpack.c.l.b16 %v1460
    %v1493 = vpack.c.b16 %v1478, %v1477
    %v1494 = vpack.c.b16 %v1480, %v1479
    %v1495 = vpack.c.b16 %v1482, %v1481
    %v1496 = vpack.c.b16 %v1484, %v1483
    %v1497 = vpack.c.b16 %v1486, %v1485
    %v1498 = vpack.c.b16 %v1488, %v1487
    %v1499 = vpack.c.b16 %v1490, %v1489
    %v1500 = vpack.c.b16 %v1492, %v1491
    %1509 = vmatpush.bf16.msra.mxu0 %v1500
    %1510 = vmatpush.bf16.msra.mxu0 %v1499
    %1511 = vmatpush.bf16.msra.mxu0 %v1498
    %1512 = vmatpush.bf16.msra.mxu0 %v1497
    %1513 = vmatpush.bf16.msra.mxu0 %v1496
    %1514 = vmatpush.bf16.msra.mxu0 %v1495
    %1515 = vmatpush.bf16.msra.mxu0 %v1494
    %1516 = vmatpush.bf16.msra.mxu0 %v1493
    %1517 = vmatmul.bf16.gmra.mxu0 %v483
    %v1518 = vpop.f32.mrf.mxu0
    %v1519 = vadd.f32 0.0, %v1518
    %v1520 = vpop.f32.mrf.mxu0
    %1521 = vdwg.mxu0
    %v1522 = vadd.f32 %v1444, %v1519
    %v1523 = vld [vmem:[%s5 + $0x340] sm:$0xf]
    %v1524 = vld [vmem:[%s5 + $0x344] sm:$0xf]
    %v1525 = vld [vmem:[%s5 + $0x348] sm:$0xf]
    %v1526 = vld [vmem:[%s5 + $0x34c] sm:$0xf]
    %v1527 = vld [vmem:[%s5 + $0x350] sm:$0xf]
    %v1528 = vld [vmem:[%s5 + $0x354] sm:$0xf]
    %v1529 = vld [vmem:[%s5 + $0x358] sm:$0xf]
    %v1530 = vld [vmem:[%s5 + $0x35c] sm:$0xf]
    %v1531 = vld [vmem:[%s5 + $0x360] sm:$0xf]
    %v1532 = vld [vmem:[%s5 + $0x364] sm:$0xf]
    %v1533 = vld [vmem:[%s5 + $0x368] sm:$0xf]
    %v1534 = vld [vmem:[%s5 + $0x36c] sm:$0xf]
    %v1535 = vld [vmem:[%s5 + $0x370] sm:$0xf]
    %v1536 = vld [vmem:[%s5 + $0x374] sm:$0xf]
    %v1537 = vld [vmem:[%s5 + $0x378] sm:$0xf]
    %v1538 = vld [vmem:[%s5 + $0x37c] sm:$0xf]
    %v1540 = vunpack.c.l.b16 %v483
    %v1541 = vpack.c.b16 %v1540, %v1540
    %v1542 = vrot.slane %v1541, 1
    %v1560 = vunpack.c.l.b16 %v1523
    %v1561 = vunpack.c.l.b16 %v1524
    %v1562 = vunpack.c.l.b16 %v1525
    %v1563 = vunpack.c.l.b16 %v1526
    %v1564 = vunpack.c.l.b16 %v1527
    %v1565 = vunpack.c.l.b16 %v1528
    %v1566 = vunpack.c.l.b16 %v1529
    %v1567 = vunpack.c.l.b16 %v1530
    %v1568 = vunpack.c.l.b16 %v1531
    %v1569 = vunpack.c.l.b16 %v1532
    %v1570 = vunpack.c.l.b16 %v1533
    %v1571 = vunpack.c.l.b16 %v1534
    %v1572 = vunpack.c.l.b16 %v1535
    %v1573 = vunpack.c.l.b16 %v1536
    %v1574 = vunpack.c.l.b16 %v1537
    %v1575 = vunpack.c.l.b16 %v1538
    %v1576 = vpack.c.b16 %v1561, %v1560
    %v1577 = vpack.c.b16 %v1563, %v1562
    %v1578 = vpack.c.b16 %v1565, %v1564
    %v1579 = vpack.c.b16 %v1567, %v1566
    %v1580 = vpack.c.b16 %v1569, %v1568
    %v1581 = vpack.c.b16 %v1571, %v1570
    %v1582 = vpack.c.b16 %v1573, %v1572
    %v1583 = vpack.c.b16 %v1575, %v1574
    %1592 = vmatpush.bf16.msra.mxu0 %v1583
    %1593 = vmatpush.bf16.msra.mxu0 %v1582
    %1594 = vmatpush.bf16.msra.mxu0 %v1581
    %1595 = vmatpush.bf16.msra.mxu0 %v1580
    %1596 = vmatpush.bf16.msra.mxu0 %v1579
    %1597 = vmatpush.bf16.msra.mxu0 %v1578
    %1598 = vmatpush.bf16.msra.mxu0 %v1577
    %1599 = vmatpush.bf16.msra.mxu0 %v1576
    %1600 = vmatmul.bf16.gmra.mxu0 %v1542
    %v1601 = vpop.f32.mrf.mxu0
    %v1602 = vadd.f32 0.0, %v1601
    %v1603 = vpop.f32.mrf.mxu0
    %1604 = vdwg.mxu0
    %v1605 = vadd.f32 %v1522, %v1602
    %v1606 = vld [vmem:[%s5 + $0x380] sm:$0xf]
    %v1607 = vld [vmem:[%s5 + $0x384] sm:$0xf]
    %v1608 = vld [vmem:[%s5 + $0x388] sm:$0xf]
    %v1609 = vld [vmem:[%s5 + $0x38c] sm:$0xf]
    %v1610 = vld [vmem:[%s5 + $0x390] sm:$0xf]
    %v1611 = vld [vmem:[%s5 + $0x394] sm:$0xf]
    %v1612 = vld [vmem:[%s5 + $0x398] sm:$0xf]
    %v1613 = vld [vmem:[%s5 + $0x39c] sm:$0xf]
    %v1614 = vld [vmem:[%s5 + $0x3a0] sm:$0xf]
    %v1615 = vld [vmem:[%s5 + $0x3a4] sm:$0xf]
    %v1616 = vld [vmem:[%s5 + $0x3a8] sm:$0xf]
    %v1617 = vld [vmem:[%s5 + $0x3ac] sm:$0xf]
    %v1618 = vld [vmem:[%s5 + $0x3b0] sm:$0xf]
    %v1619 = vld [vmem:[%s5 + $0x3b4] sm:$0xf]
    %v1620 = vld [vmem:[%s5 + $0x3b8] sm:$0xf]
    %v1621 = vld [vmem:[%s5 + $0x3bc] sm:$0xf]
    %v1622 = vrot.slane %v1541, 2
    %v1640 = vunpack.c.l.b16 %v1606
    %v1641 = vunpack.c.l.b16 %v1607
    %v1642 = vunpack.c.l.b16 %v1608
    %v1643 = vunpack.c.l.b16 %v1609
    %v1644 = vunpack.c.l.b16 %v1610
    %v1645 = vunpack.c.l.b16 %v1611
    %v1646 = vunpack.c.l.b16 %v1612
    %v1647 = vunpack.c.l.b16 %v1613
    %v1648 = vunpack.c.l.b16 %v1614
    %v1649 = vunpack.c.l.b16 %v1615
    %v1650 = vunpack.c.l.b16 %v1616
    %v1651 = vunpack.c.l.b16 %v1617
    %v1652 = vunpack.c.l.b16 %v1618
    %v1653 = vunpack.c.l.b16 %v1619
    %v1654 = vunpack.c.l.b16 %v1620
    %v1655 = vunpack.c.l.b16 %v1621
    %v1656 = vpack.c.b16 %v1641, %v1640
    %v1657 = vpack.c.b16 %v1643, %v1642
    %v1658 = vpack.c.b16 %v1645, %v1644
    %v1659 = vpack.c.b16 %v1647, %v1646
    %v1660 = vpack.c.b16 %v1649, %v1648
    %v1661 = vpack.c.b16 %v1651, %v1650
    %v1662 = vpack.c.b16 %v1653, %v1652
    %v1663 = vpack.c.b16 %v1655, %v1654
    %1672 = vmatpush.bf16.msra.mxu0 %v1663
    %1673 = vmatpush.bf16.msra.mxu0 %v1662
    %1674 = vmatpush.bf16.msra.mxu0 %v1661
    %1675 = vmatpush.bf16.msra.mxu0 %v1660
    %1676 = vmatpush.bf16.msra.mxu0 %v1659
    %1677 = vmatpush.bf16.msra.mxu0 %v1658
    %1678 = vmatpush.bf16.msra.mxu0 %v1657
    %1679 = vmatpush.bf16.msra.mxu0 %v1656
    %1680 = vmatmul.bf16.gmra.mxu0 %v1622
    %v1681 = vpop.f32.mrf.mxu0
    %v1682 = vadd.f32 0.0, %v1681
    %v1683 = vpop.f32.mrf.mxu0
    %1684 = vdwg.mxu0
    %v1685 = vadd.f32 %v1605, %v1682
    %v1686 = vld [vmem:[%s5 + $0x3c0] sm:$0xf]
    %v1687 = vld [vmem:[%s5 + $0x3c4] sm:$0xf]
    %v1688 = vld [vmem:[%s5 + $0x3c8] sm:$0xf]
    %v1689 = vld [vmem:[%s5 + $0x3cc] sm:$0xf]
    %v1690 = vld [vmem:[%s5 + $0x3d0] sm:$0xf]
    %v1691 = vld [vmem:[%s5 + $0x3d4] sm:$0xf]
    %v1692 = vld [vmem:[%s5 + $0x3d8] sm:$0xf]
    %v1693 = vld [vmem:[%s5 + $0x3dc] sm:$0xf]
    %v1694 = vld [vmem:[%s5 + $0x3e0] sm:$0xf]
    %v1695 = vld [vmem:[%s5 + $0x3e4] sm:$0xf]
    %v1696 = vld [vmem:[%s5 + $0x3e8] sm:$0xf]
    %v1697 = vld [vmem:[%s5 + $0x3ec] sm:$0xf]
    %v1698 = vld [vmem:[%s5 + $0x3f0] sm:$0xf]
    %v1699 = vld [vmem:[%s5 + $0x3f4] sm:$0xf]
    %v1700 = vld [vmem:[%s5 + $0x3f8] sm:$0xf]
    %v1701 = vld [vmem:[%s5 + $0x3fc] sm:$0xf]
    %v1702 = vrot.slane %v1541, 3
    %v1720 = vunpack.c.l.b16 %v1686
    %v1721 = vunpack.c.l.b16 %v1687
    %v1722 = vunpack.c.l.b16 %v1688
    %v1723 = vunpack.c.l.b16 %v1689
    %v1724 = vunpack.c.l.b16 %v1690
    %v1725 = vunpack.c.l.b16 %v1691
    %v1726 = vunpack.c.l.b16 %v1692
    %v1727 = vunpack.c.l.b16 %v1693
    %v1728 = vunpack.c.l.b16 %v1694
    %v1729 = vunpack.c.l.b16 %v1695
    %v1730 = vunpack.c.l.b16 %v1696
    %v1731 = vunpack.c.l.b16 %v1697
    %v1732 = vunpack.c.l.b16 %v1698
    %v1733 = vunpack.c.l.b16 %v1699
    %v1734 = vunpack.c.l.b16 %v1700
    %v1735 = vunpack.c.l.b16 %v1701
    %v1736 = vpack.c.b16 %v1721, %v1720
    %v1737 = vpack.c.b16 %v1723, %v1722
    %v1738 = vpack.c.b16 %v1725, %v1724
    %v1739 = vpack.c.b16 %v1727, %v1726
    %v1740 = vpack.c.b16 %v1729, %v1728
    %v1741 = vpack.c.b16 %v1731, %v1730
    %v1742 = vpack.c.b16 %v1733, %v1732
    %v1743 = vpack.c.b16 %v1735, %v1734
    %1752 = vmatpush.bf16.msra.mxu0 %v1743
    %1753 = vmatpush.bf16.msra.mxu0 %v1742
    %1754 = vmatpush.bf16.msra.mxu0 %v1741
    %1755 = vmatpush.bf16.msra.mxu0 %v1740
    %1756 = vmatpush.bf16.msra.mxu0 %v1739
    %1757 = vmatpush.bf16.msra.mxu0 %v1738
    %1758 = vmatpush.bf16.msra.mxu0 %v1737
    %1759 = vmatpush.bf16.msra.mxu0 %v1736
    %1760 = vmatmul.bf16.gmra.mxu0 %v1702
    %v1761 = vpop.f32.mrf.mxu0
    %v1762 = vadd.f32 0.0, %v1761
    %v1763 = vpop.f32.mrf.mxu0
    %1764 = vdwg.mxu0
    %v1765 = vadd.f32 %v1685, %v1762
    %v1766 = vld [vmem:[%s6] sm:$0x1]
    %v1768 = vperm.slane %v1766, 0
    %v1770 = vadd.f32 %v1765, %v1768
    %v1771 = vlaneseq
    %v1772 = vand.u32 %v1771, 127
    %vm1773 = vcmp.eq.s32.totalorder %v1772, 0
    %v1774 = vsub.f32 0.0, %v1770
    %v1775 = vmul.f32 %v1774, 1.442695
    %v1776 = vpow.pop %v1775
    %v1777 = vadd.f32 %v1776, 1.0
    %v1778 = vrcp.pop %v1777
    %v1779 = vmul.f32 %v1777, %v1778
    %v1780 = vsub.f32 1.0, %v1779
    %v1781 = vmul.f32 %v1778, %v1780
    %v1782 = vadd.f32 %v1778, %v1781
    %vm1783 = vweird.f32 %v1777
    %vm1784 = vweird.f32 %v1778
    %vm1785 = vmor %vm1783, %vm1784
    %v1786 = vsel %vm1785, %v1778, %v1782
    %v1787 = vand.u32 2147483647, %v1777
    %vm1788 = vcmp.eq.f32.partialorder %v1787, 8.507059e+37
    %v1789 = vand.u32 %v1777, 2147483648
    %v1790 = vor.u32 1.1754944e-38, %v1789
    %v1791 = vsel %vm1788, %v1790, %v1786
    %v1792 = vmul.f32 1.0, %v1791
    %v1793 = vsel %vm1773, %v1792, %v1770
    %vm1794 = vcmp.ge.s32.totalorder %v1772, 3
    %vm1795 = vcmp.lt.s32.totalorder %v1772, 13
    %vm1796 = vmand %vm1794, %vm1795
    %v1797 = vsel %vm1796, %v1770, -inf
    %vm1798 = vcmask 1041408
    %v1799 = vsel %vm1798, %v1797, -inf
    %1800 = vmax.xlane.f32.xlu0 %v1799
    %v1801 = vpop.xlane.xlu0 %1800
    %v1802 = vsub.f32 %v1797, %v1801
    %v1803 = vmul.f32 %v1802, 1.442695
    %v1804 = vpow.pop %v1803
    %v1805 = vsel %vm1796, %v1804, 0.0
    %v1806 = vsel %vm1798, %v1805, 0.0
    %1807 = vadd.xlane.f32.xlu0 %v1806
    %v1808 = vpop.xlane.xlu0 %1807
    %v1809 = vrcp.pop %v1808
    %v1810 = vmul.f32 %v1808, %v1809
    %v1811 = vsub.f32 1.0, %v1810
    %v1812 = vmul.f32 %v1809, %v1811
    %v1813 = vadd.f32 %v1809, %v1812
    %vm1814 = vweird.f32 %v1808
    %vm1815 = vweird.f32 %v1809
    %vm1816 = vmor %vm1814, %vm1815
    %v1817 = vsel %vm1816, %v1809, %v1813
    %v1818 = vand.u32 2147483647, %v1808
    %vm1819 = vcmp.eq.f32.partialorder %v1818, 8.507059e+37
    %v1820 = vand.u32 %v1808, 2147483648
    %v1821 = vor.u32 1.1754944e-38, %v1820
    %v1822 = vsel %vm1819, %v1821, %v1817
    %v1823 = vmul.f32 %v1805, %v1822
    %v1824 = vsel %vm1796, %v1823, %v1793
    %1825 = vst [vmem:[#allocation2] sm:$0x3] %v1824
    // Predicated region
    $region30: #{a_call__.5} parent=1 // pred_check
      _
    $region31: #{a_call__.5} parent=1 // pred_check_branch
      %1827 = sbr.rel (0) target = $region33
    $region32: #{a_call__.5} parent=1 // pred_region
      %1829 = vsyncadd [#allocation3], 0
      %s1831 = sshll.u32 [#allocation2], 4
      %s1832 = int_to_ptr.vmem [resolvable:$true] %s1831
      %s1833 = sshll.u32 %s7, 4
      %s1834 = int_to_ptr.hbm [resolvable:$true] %s1833
      %1836 = dma.vmem_to_hbm [thread:$0]  %s1832, 32, %s1834, [#allocation3]
    $region33: #{a_call__.5} parent=1 // pred_fallthru
      _
    // Predicated region
    $region34: #{a_call__.5} parent=1 // pred_check
      _
    $region35: #{a_call__.5} parent=1 // pred_check_branch
      %1838 = sbr.rel (0) target = $region37
    $region36: #{a_call__.5} parent=1 // pred_region
      %1840 = dma.done [#allocation3], 32
    $region37: #{a_call__.5} parent=1 // pred_fallthru
      _
    %1841 = vsyncpa [#allocation3], 1

</llo_original>
